<compile_context>
chip_gen: v7x
topology: tpu7x:2x2x1
jax: 0.10.0
libtpu: 0.0.40
codegen_flags: <defaults>
</compile_context>

<pallas_src>
import functools

import numpy as np
import jax
import jax.numpy as jnp
from jax import lax
from jax.experimental import pallas as pl
from jax.experimental.pallas import tpu as pltpu


# ---------------------------------------------------------------------------
# In-kernel helpers (all static-shape slicing / concat / matmul ops)
# ---------------------------------------------------------------------------
def _reflect_pad1(x):
    """ReflectionPad2d(1) on an (H, W, C) VMEM value.  Requires H, W >= 2."""
    x = jnp.concatenate([x[1:2], x, x[-2:-1]], axis=0)
    x = jnp.concatenate([x[:, 1:2], x, x[:, -2:-1]], axis=1)
    return x


def _im2col3x3(xp, H, W):
    """(H+2, W+2, C) padded image -> (H*W, 9*C) patch matrix (tap-major)."""
    C = xp.shape[-1]
    cols = []
    for kh in range(3):
        for kw in range(3):
            cols.append(xp[kh:kh + H, kw:kw + W, :].reshape(H * W, C))
    return jnp.concatenate(cols, axis=-1)


def _elu(x):
    # ELU(alpha=1) in f32; clamp the exp argument so the dead branch is finite.
    return jnp.where(x > 0, x, jnp.exp(jnp.minimum(x, 0.0)) - 1.0)


def _sigmoid(x):
    # Numerically stable sigmoid; reciprocal goes to the EUP (approx) path.
    e = jnp.exp(-jnp.abs(x))
    r = pl.reciprocal(1.0 + e, approx=True)
    return jnp.where(x >= 0.0, r, e * r)


_COMPILER_PARAMS = pltpu.CompilerParams(
    dimension_semantics=("parallel",),
    vmem_limit_bytes=64 * 1024 * 1024,
)


# ---------------------------------------------------------------------------
# Kernel A: ConvBlock = ReflectionPad2d(1) + 3x3 conv + ELU
#   input : (1, C_in, H*W) channels-first bf16   (or (1, H, W, C_in) NHWC)
#   output: (1, C_out, H*W) channels-first bf16  (lane-dense store)
# ---------------------------------------------------------------------------
def _convblock_kernel(x_ref, w_ref, b_ref, o_ref, *, H, W, C_in, C_out, in_cf):
    if in_cf:
        x = jnp.transpose(x_ref[0]).reshape(H, W, C_in)     # (H, W, C_in)
    else:
        x = x_ref[0]                                         # (H, W, C_in)
    p = _im2col3x3(_reflect_pad1(x), H, W)                   # (H*W, 9*C_in)
    # (9*C_in, C_out)^T @ (H*W, 9*C_in)^T -> (C_out, H*W): lane-dense result,
    # single MXU matmul with contraction depth 9*C_in.
    acc = lax.dot_general(w_ref[...], p, (((0,), (1,)), ((), ())),
                          preferred_element_type=jnp.float32)
    acc = _elu(acc + b_ref[...])                             # bias (C_out, 1)
    o_ref[...] = acc.astype(jnp.bfloat16).reshape(1, C_out, H * W)


def _conv_block_call(x, w, b, *, H, W, C_in, C_out, in_cf):
    N = x.shape[0]
    kernel = functools.partial(_convblock_kernel, H=H, W=W, C_in=C_in,
                               C_out=C_out, in_cf=in_cf)
    if in_cf:
        x_spec = pl.BlockSpec((1, C_in, H * W), lambda n: (n, 0, 0))
    else:
        x_spec = pl.BlockSpec((1, H, W, C_in), lambda n: (n, 0, 0, 0))
    return pl.pallas_call(
        kernel,
        out_shape=jax.ShapeDtypeStruct((N, C_out, H * W), jnp.bfloat16),
        grid_spec=pltpu.PrefetchScalarGridSpec(
            num_scalar_prefetch=0,
            grid=(N,),
            in_specs=[x_spec,
                      pl.BlockSpec(w.shape, lambda n: (0, 0)),
                      pl.BlockSpec(b.shape, lambda n: (0, 0))],
            out_specs=pl.BlockSpec((1, C_out, H * W), lambda n: (n, 0, 0)),
        ),
        compiler_params=_COMPILER_PARAMS,
    )(x, w, b)


# ---------------------------------------------------------------------------
# Kernel B: fused [nearest-2x (H axis) + reflect pad + concat(skip) + 3x3 conv
#            + ELU]  and optionally [dispconv 3x3 + sigmoid]
#   main input : (1, C_main, H * 2W) channels-first bf16 (W already doubled)
#   skip input : (1, 2H, 2W, C_skip) NHWC bf16 (encoder feature)
#   outputs    : (1, C_out, 4*H*W) bf16  [, (1, C_disp, 4*H*W) f32]
# ---------------------------------------------------------------------------
def _upconv_kernel(*refs, H, W, C_main, C_skip, C_out, C_disp,
                   has_skip, has_disp):
    H2, W2 = 2 * H, 2 * W
    i = 0
    x_ref = refs[i]; i += 1
    skip_ref = None
    if has_skip:
        skip_ref = refs[i]; i += 1
    w1_ref, b1_ref = refs[i], refs[i + 1]; i += 2
    wd_ref = bd_ref = None
    if has_disp:
        wd_ref, bd_ref = refs[i], refs[i + 1]; i += 2
    xout_ref = refs[i]; i += 1
    disp_ref = refs[i] if has_disp else None

    # Main input: channels-first (C_main, H*W2) with W already doubled by the
    # caller; finish the nearest 2x upsample by duplicating rows in VMEM.
    xm = jnp.transpose(x_ref[0]).reshape(H, W2, C_main)
    xm = jnp.concatenate([xm[:, None], xm[:, None]], axis=1)
    xm = xm.reshape(H2, W2, C_main)
    # Reflection pad of a 2x-nearest-upsampled image == edge values, which is
    # exactly what _reflect_pad1 picks here (rows/cols 1 and -2 duplicate 0/-1).
    patches = _im2col3x3(_reflect_pad1(xm), H2, W2)          # (H2*W2, 9*C_main)

    if has_skip:
        sk = skip_ref[0]                                      # (H2, W2, C_skip)
        patches = jnp.concatenate(
            [patches, _im2col3x3(_reflect_pad1(sk), H2, W2)], axis=-1)

    # Channel-concat conv == single matmul against the packed [main; skip]
    # weight, contraction depth 9*(C_main + C_skip).
    acc = jnp.dot(patches, w1_ref[...], preferred_element_type=jnp.float32)
    acc = _elu(acc + b1_ref[...])                             # (H2*W2, C_out)

    # Lane-dense channels-first store.
    xout_ref[...] = jnp.transpose(acc).astype(jnp.bfloat16).reshape(
        1, C_out, H2 * W2)

    if has_disp:
        y = acc.astype(jnp.bfloat16).reshape(H2, W2, C_out)
        pd = _im2col3x3(_reflect_pad1(y), H2, W2)             # (H2*W2, 9*C_out)
        d = lax.dot_general(wd_ref[...], pd, (((0,), (1,)), ((), ())),
                            preferred_element_type=jnp.float32)
        d = _sigmoid(d + bd_ref[...])                         # (C_disp, H2*W2)
        disp_ref[...] = d.reshape(1, C_disp, H2 * W2)


def _upconv_call(x, skip, w1, b1, wd, bd, *, H, W, C_main, C_skip, C_out):
    N = x.shape[0]
    H2, W2 = 2 * H, 2 * W
    has_skip = skip is not None
    has_disp = wd is not None
    C_disp = wd.shape[1] if has_disp else 1
    kernel = functools.partial(_upconv_kernel, H=H, W=W, C_main=C_main,
                               C_skip=C_skip, C_out=C_out, C_disp=C_disp,
                               has_skip=has_skip, has_disp=has_disp)

    inputs = [x]
    in_specs = [pl.BlockSpec((1, C_main, H * W2), lambda n: (n, 0, 0))]
    if has_skip:
        inputs.append(skip)
        in_specs.append(pl.BlockSpec((1, H2, W2, C_skip),
                                     lambda n: (n, 0, 0, 0)))
    inputs += [w1, b1]
    in_specs += [pl.BlockSpec(w1.shape, lambda n: (0, 0)),
                 pl.BlockSpec(b1.shape, lambda n: (0, 0))]
    if has_disp:
        inputs += [wd, bd]
        in_specs += [pl.BlockSpec(wd.shape, lambda n: (0, 0)),
                     pl.BlockSpec(bd.shape, lambda n: (0, 0))]

    out_shape = [jax.ShapeDtypeStruct((N, C_out, H2 * W2), jnp.bfloat16)]
    out_specs = [pl.BlockSpec((1, C_out, H2 * W2), lambda n: (n, 0, 0))]
    if has_disp:
        out_shape.append(jax.ShapeDtypeStruct((N, C_disp, H2 * W2),
                                              jnp.float32))
        out_specs.append(pl.BlockSpec((1, C_disp, H2 * W2),
                                      lambda n: (n, 0, 0)))

    outs = pl.pallas_call(
        kernel,
        out_shape=tuple(out_shape),
        grid_spec=pltpu.PrefetchScalarGridSpec(
            num_scalar_prefetch=0,
            grid=(N,),
            in_specs=in_specs,
            out_specs=tuple(out_specs),
        ),
        compiler_params=_COMPILER_PARAMS,
    )(*inputs)
    if has_disp:
        return outs[0], outs[1]
    return outs[0], None


# ---------------------------------------------------------------------------
# DepthDecoder: deterministic synthetic params + forward pass
# ---------------------------------------------------------------------------
class DepthDecoderPallas:
    def __init__(self, num_ch_enc, scales=range(4), num_output_channels=1,
                 use_skips=True, lite_model=None, key=None):
        self.num_output_channels = num_output_channels
        self.use_skips = use_skips
        self.scales = list(scales)
        self.num_ch_enc = list(num_ch_enc)
        self.num_ch_dec = np.array([16, 32, 64, 128, 256])
        if lite_model == "mobilev3":
            self.num_ch_dec = np.array([4, 12, 20, 40, 80])

        key = key if key is not None else jax.random.PRNGKey(0)
        self.params = {}

        def init_conv(k, cin, cout):
            kw_, kb_ = jax.random.split(k)
            scale = 1.0 / np.sqrt(cin * 9)
            w = jax.random.uniform(kw_, (3, 3, cin, cout), jnp.float32,
                                   -scale, scale)      # HWIO
            b = jax.random.uniform(kb_, (cout,), jnp.float32, -scale, scale)
            return w, b

        def pack(w):  # (3,3,cin,cout) -> (9*cin, cout) bf16, tap-major rows
            cin, cout = w.shape[2], w.shape[3]
            return w.reshape(9 * cin, cout).astype(jnp.bfloat16)

        idx = 0
        for i in range(4, -1, -1):
            cdec = int(self.num_ch_dec[i])
            cin0 = self.num_ch_enc[-1] if i == 4 else int(self.num_ch_dec[i + 1])
            w0, b0 = init_conv(jax.random.fold_in(key, idx), cin0, cdec)
            idx += 1
            self.params[("upconv", i, 0)] = (pack(w0), b0.reshape(cdec, 1))

            cskip = int(self.num_ch_enc[i - 1]) if (self.use_skips and i > 0) else 0
            w1, b1 = init_conv(jax.random.fold_in(key, idx), cdec + cskip, cdec)
            idx += 1
            w1_main = w1[:, :, :cdec, :].reshape(9 * cdec, cdec)
            if cskip > 0:
                w1_skip = w1[:, :, cdec:, :].reshape(9 * cskip, cdec)
                w1_packed = jnp.concatenate([w1_main, w1_skip], axis=0)
            else:
                w1_packed = w1_main
            self.params[("upconv", i, 1)] = (w1_packed.astype(jnp.bfloat16),
                                             b1.reshape(1, cdec))
        for s in self.scales:
            cdec = int(self.num_ch_dec[s])
            wd, bd = init_conv(jax.random.fold_in(key, idx), cdec,
                               self.num_output_channels)
            idx += 1
            self.params[("dispconv", s)] = (
                pack(wd), bd.reshape(self.num_output_channels, 1))

    def __call__(self, input_features):
        # Encoder features: NHWC f32 -> bf16 (half the HBM traffic in-kernel).
        feats = [f.astype(jnp.bfloat16) for f in input_features]
        N, H, W, _ = feats[-1].shape
        C_disp = self.num_output_channels
        outputs = {}
        x = feats[-1]
        in_cf = False
        for i in range(4, -1, -1):
            cdec = int(self.num_ch_dec[i])
            cin0 = self.num_ch_enc[-1] if i == 4 else int(self.num_ch_dec[i + 1])

            # ConvBlock (reflect pad + 3x3 conv + ELU), lane-dense CF output.
            w0, b0 = self.params[("upconv", i, 0)]
            x = _conv_block_call(x, w0, b0, H=H, W=W, C_in=cin0, C_out=cdec,
                                 in_cf=in_cf)

            # Glue: nearest 2x along W only (H doubling is fused in-kernel).
            x = jnp.repeat(x.reshape(N, cdec, H, W), 2, axis=3)
            x = x.reshape(N, cdec, H * 2 * W)

            skip = feats[i - 1] if (self.use_skips and i > 0) else None
            cskip = skip.shape[-1] if skip is not None else 0
            w1, b1 = self.params[("upconv", i, 1)]
            if i in self.scales:
                wd, bd = self.params[("dispconv", i)]
            else:
                wd = bd = None

            x, disp = _upconv_call(x, skip, w1, b1, wd, bd, H=H, W=W,
                                   C_main=cdec, C_skip=cskip, C_out=cdec)
            H, W = 2 * H, 2 * W
            in_cf = True
            if disp is not None:
                outputs[("disp", i)] = jnp.transpose(
                    disp.reshape(N, C_disp, H, W), (0, 2, 3, 1))
        return outputs


# ---------------------------------------------------------------------------
if __name__ == "__main__":
    key = jax.random.PRNGKey(0)

    # Small synthetic encoder features (5 scales, NHWC); spatial halves per level.
    num_ch_enc = [4, 8, 16, 32, 64]
    spatial = [32, 16, 8, 4, 2]
    N = 2
    input_features = []
    for i, (c, s) in enumerate(zip(num_ch_enc, spatial)):
        k = jax.random.fold_in(key, 100 + i)
        input_features.append(jax.random.normal(k, (N, s, s, c), jnp.float32))

    decoder = DepthDecoderPallas(num_ch_enc, scales=range(4),
                                 num_output_channels=1, use_skips=True,
                                 key=jax.random.PRNGKey(1))

    outputs = decoder(input_features)
    for _, v in sorted(outputs.items()):
        jax.block_until_ready(v)

    # Sanity: disp outputs exist for scales 0..3, are finite and in [0, 1].
    for s in range(4):
        d = outputs[("disp", s)]
        assert d.shape == (N, spatial[s] * 2, spatial[s] * 2, 1), d.shape
        assert bool(jnp.all(jnp.isfinite(d)))
        assert bool(jnp.all((d >= 0.0) & (d <= 1.0)))

    print("KERNEL_OK")
</pallas_src>

<mosaic_0001>
module attributes {stable_mosaic.version = 11 : i64} {
  func.func @_convblock_kernel(%arg0: i32, %arg1: memref<1x2x2x64xbf16, #tpu.memory_space<vmem>>, %arg2: memref<576x256xbf16, #tpu.memory_space<vmem>>, %arg3: memref<256x1xf32, #tpu.memory_space<vmem>>, %arg4: memref<1x256x4xbf16, #tpu.memory_space<vmem>>) attributes {dimension_semantics = [#tpu.dimension_semantics<parallel>], iteration_bounds = array<i64: 2>, scalar_prefetch = 0 : i64, scratch_operands = 0 : i64, tpu.core_type = #tpu.core_type<tc>, window_params = [{transform_indices = @transform_0, window_bounds = array<i64: 1, 2, 2, 64>}, {pipeline_mode = #tpu.pipeline_mode<synchronous>, transform_indices = @transform_1, window_bounds = array<i64: 576, 256>}, {pipeline_mode = #tpu.pipeline_mode<synchronous>, transform_indices = @transform_2, window_bounds = array<i64: 256, 1>}, {transform_indices = @transform_3, window_bounds = array<i64: 1, 256, 4>}]} {
    %c0 = arith.constant 0 : index
    %c0_0 = arith.constant 0 : index
    %c0_1 = arith.constant 0 : index
    %c0_2 = arith.constant 0 : index
    %0 = vector.load %arg1[%c0, %c0_0, %c0_1, %c0_2] : memref<1x2x2x64xbf16, #tpu.memory_space<vmem>>, vector<1x2x2x64xbf16>
    %1 = vector.shape_cast %0 : vector<1x2x2x64xbf16> to vector<2x2x64xbf16>
    %2 = vector.extract_strided_slice %1 {offsets = [1, 0, 0], sizes = [1, 2, 64], strides = [1, 1, 1]} : vector<2x2x64xbf16> to vector<1x2x64xbf16>
    %3 = vector.extract_strided_slice %1 {offsets = [0, 0, 0], sizes = [1, 2, 64], strides = [1, 1, 1]} : vector<2x2x64xbf16> to vector<1x2x64xbf16>
    %4 = tpu.concatenate %2, %1, %3 in 0 : vector<1x2x64xbf16>, vector<2x2x64xbf16>, vector<1x2x64xbf16> -> vector<4x2x64xbf16>
    %5 = vector.extract_strided_slice %4 {offsets = [0, 1, 0], sizes = [4, 1, 64], strides = [1, 1, 1]} : vector<4x2x64xbf16> to vector<4x1x64xbf16>
    %6 = vector.extract_strided_slice %4 {offsets = [0, 0, 0], sizes = [4, 1, 64], strides = [1, 1, 1]} : vector<4x2x64xbf16> to vector<4x1x64xbf16>
    %7 = tpu.concatenate %5, %4, %6 in 1 : vector<4x1x64xbf16>, vector<4x2x64xbf16>, vector<4x1x64xbf16> -> vector<4x4x64xbf16>
    %8 = vector.extract_strided_slice %7 {offsets = [0, 0, 0], sizes = [2, 2, 64], strides = [1, 1, 1]} : vector<4x4x64xbf16> to vector<2x2x64xbf16>
    %9 = vector.shape_cast %8 : vector<2x2x64xbf16> to vector<4x64xbf16>
    %10 = vector.extract_strided_slice %7 {offsets = [0, 1, 0], sizes = [2, 2, 64], strides = [1, 1, 1]} : vector<4x4x64xbf16> to vector<2x2x64xbf16>
    %11 = vector.shape_cast %10 : vector<2x2x64xbf16> to vector<4x64xbf16>
    %12 = vector.extract_strided_slice %7 {offsets = [0, 2, 0], sizes = [2, 2, 64], strides = [1, 1, 1]} : vector<4x4x64xbf16> to vector<2x2x64xbf16>
    %13 = vector.shape_cast %12 : vector<2x2x64xbf16> to vector<4x64xbf16>
    %14 = vector.extract_strided_slice %7 {offsets = [1, 0, 0], sizes = [2, 2, 64], strides = [1, 1, 1]} : vector<4x4x64xbf16> to vector<2x2x64xbf16>
    %15 = vector.shape_cast %14 : vector<2x2x64xbf16> to vector<4x64xbf16>
    %16 = vector.extract_strided_slice %7 {offsets = [1, 1, 0], sizes = [2, 2, 64], strides = [1, 1, 1]} : vector<4x4x64xbf16> to vector<2x2x64xbf16>
    %17 = vector.shape_cast %16 : vector<2x2x64xbf16> to vector<4x64xbf16>
    %18 = vector.extract_strided_slice %7 {offsets = [1, 2, 0], sizes = [2, 2, 64], strides = [1, 1, 1]} : vector<4x4x64xbf16> to vector<2x2x64xbf16>
    %19 = vector.shape_cast %18 : vector<2x2x64xbf16> to vector<4x64xbf16>
    %20 = vector.extract_strided_slice %7 {offsets = [2, 0, 0], sizes = [2, 2, 64], strides = [1, 1, 1]} : vector<4x4x64xbf16> to vector<2x2x64xbf16>
    %21 = vector.shape_cast %20 : vector<2x2x64xbf16> to vector<4x64xbf16>
    %22 = vector.extract_strided_slice %7 {offsets = [2, 1, 0], sizes = [2, 2, 64], strides = [1, 1, 1]} : vector<4x4x64xbf16> to vector<2x2x64xbf16>
    %23 = vector.shape_cast %22 : vector<2x2x64xbf16> to vector<4x64xbf16>
    %24 = vector.extract_strided_slice %7 {offsets = [2, 2, 0], sizes = [2, 2, 64], strides = [1, 1, 1]} : vector<4x4x64xbf16> to vector<2x2x64xbf16>
    %25 = vector.shape_cast %24 : vector<2x2x64xbf16> to vector<4x64xbf16>
    %26 = tpu.concatenate %9, %11, %13, %15, %17, %19, %21, %23, %25 in 1 : vector<4x64xbf16>, vector<4x64xbf16>, vector<4x64xbf16>, vector<4x64xbf16>, vector<4x64xbf16>, vector<4x64xbf16>, vector<4x64xbf16>, vector<4x64xbf16>, vector<4x64xbf16> -> vector<4x576xbf16>
    %c0_3 = arith.constant 0 : index
    %c0_4 = arith.constant 0 : index
    %27 = vector.load %arg2[%c0_3, %c0_4] : memref<576x256xbf16, #tpu.memory_space<vmem>>, vector<576x256xbf16>
    %cst = arith.constant dense<0.000000e+00> : vector<256x4xf32>
    %28 = tpu.matmul %27, %26, %cst {dimension_numbers = #tpu.dot_dimension_numbers<[0], [1], [1], [0], [0, 1, 1, 0], [], []>} : vector<576x256xbf16>, vector<4x576xbf16>, vector<256x4xf32> -> vector<256x4xf32>
    %c0_5 = arith.constant 0 : index
    %c0_6 = arith.constant 0 : index
    %29 = vector.load %arg3[%c0_5, %c0_6] : memref<256x1xf32, #tpu.memory_space<vmem>>, vector<256x1xf32>
    %30 = vector.broadcast %29 : vector<256x1xf32> to vector<256x4xf32>
    %31 = arith.addf %28, %30 : vector<256x4xf32>
    %cst_7 = arith.constant 0.000000e+00 : f32
    %32 = vector.broadcast %cst_7 : f32 to vector<256x4xf32>
    %33 = arith.cmpf ogt, %31, %32 : vector<256x4xf32>
    %cst_8 = arith.constant 0.000000e+00 : f32
    %34 = vector.broadcast %cst_8 : f32 to vector<256x4xf32>
    %35 = arith.minimumf %31, %34 : vector<256x4xf32>
    %36 = math.exp %35 : vector<256x4xf32>
    %cst_9 = arith.constant 1.000000e+00 : f32
    %37 = vector.broadcast %cst_9 : f32 to vector<256x4xf32>
    %38 = arith.subf %36, %37 : vector<256x4xf32>
    %39 = arith.select %33, %31, %38 : vector<256x4xi1>, vector<256x4xf32>
    %40 = arith.truncf %39 : vector<256x4xf32> to vector<256x4xbf16>
    %41 = vector.shape_cast %40 : vector<256x4xbf16> to vector<1x256x4xbf16>
    %c0_10 = arith.constant 0 : index
    %c0_11 = arith.constant 0 : index
    %c0_12 = arith.constant 0 : index
    %42 = vector.load %arg4[%c0_10, %c0_11, %c0_12] : memref<1x256x4xbf16, #tpu.memory_space<vmem>>, vector<1x256x4xbf16>
    tpu.vector_store %arg4[%c0_10, %c0_11, %c0_12], %41 {strides = array<i32>} : memref<1x256x4xbf16, #tpu.memory_space<vmem>>, vector<1x256x4xbf16>,
    return
  }
  func.func @transform_0(%arg0: i32) -> (i32, i32, i32, i32) {
    %c0_i32 = arith.constant 0 : i32
    %c0_i32_0 = arith.constant 0 : i32
    %c0_i32_1 = arith.constant 0 : i32
    %c0_i32_2 = arith.constant 0 : i32
    return %arg0, %c0_i32, %c0_i32_0, %c0_i32_1 : i32, i32, i32, i32
  }
  func.func @transform_1(%arg0: i32) -> (i32, i32) {
    %c0_i32 = arith.constant 0 : i32
    %c0_i32_0 = arith.constant 0 : i32
    %c0_i32_1 = arith.constant 0 : i32
    return %c0_i32, %c0_i32_0 : i32, i32
  }
  func.func @transform_2(%arg0: i32) -> (i32, i32) {
    %c0_i32 = arith.constant 0 : i32
    %c0_i32_0 = arith.constant 0 : i32
    %c0_i32_1 = arith.constant 0 : i32
    return %c0_i32, %c0_i32_0 : i32, i32
  }
  func.func @transform_3(%arg0: i32) -> (i32, i32, i32) {
    %c0_i32 = arith.constant 0 : i32
    %c0_i32_0 = arith.constant 0 : i32
    %c0_i32_1 = arith.constant 0 : i32
    return %arg0, %c0_i32, %c0_i32_0 : i32, i32, i32
  }
}

</mosaic_0001>

<llo_original>
// kernel: tpu_custom_call.1
$region0: #{tpu_custom_call.1}
  #allocation0 [shape = 'u32[]', space=smem, size = 0x4, offset = 0x4, fixed_abs, tag = 'smem constant byte address 0x4 - core index']
  #allocation1 [shape = 'u32[144,128]{1,0:T(1,128)}', space=vmem, size = 0x12000, scoped, tag = 'internal scratch']
  %s0 = inlined_call_operand.hbm [shape: bf16[2,2,2,64], index: 0, kind: input, shape index: {}]
  %s1 = inlined_call_operand.hbm [shape: bf16[576,256], index: 1, kind: input, shape index: {}]
  %s2 = inlined_call_operand.hbm [shape: f32[256,1], index: 2, kind: input, shape index: {}]
  %s3 = inlined_call_operand.hbm [shape: bf16[2,256,4], index: 3, kind: output, shape index: {}]
  %s4 = sld [smem:[#allocation0]]
  $region57: #{tpu_custom_call.1} parent=0
    _
  %s6 = ssub.s32 1, %s4
  %s7 = scalar_select 0, %s6, %s4
  $region1: #{tpu_custom_call.1} parent=0
    #allocation2 [shape = 'u8[2048]{0}', space=vmem, size = 0x800, scoped, tag = 'input window, operand 0']
    #allocation3 [shape = 's32[2]{0}', space=sflag, size = 0x8, scoped, tag = 'scoped memory for tpu_custom_call.1']
    #allocation4 [shape = 's32[2]{0}', space=sflag, size = 0x8, scoped, tag = 'scoped memory for tpu_custom_call.1']
    #allocation5 [shape = 'u8[294912]{0}', space=vmem, size = 0x48000, scoped, tag = 'input window, operand 1, single buffered']
    #allocation6 [shape = 's32[1]{0}', space=sflag, size = 0x4, scoped, tag = 'scoped memory for tpu_custom_call.1']
    #allocation7 [shape = 'u8[131072]{0}', space=vmem, size = 0x20000, scoped, tag = 'input window, operand 2, single buffered']
    #allocation8 [shape = 'u8[131072]{0}', space=vmem, size = 0x20000, scoped, tag = 'output window, operand 0']
    %8 = vsyncpa [#allocation3], 0
    %s9 = scalar_lea.sflag [#allocation3], 1
    %10 = vsyncpa %s9, 0
    %11 = vsyncpa [#allocation6], 0
    %12 = vsyncpa [#allocation4], 0
    %s13 = scalar_lea.sflag [#allocation4], 1
    %14 = vsyncpa %s13, 0
    loop: start=0, step=1, limit=4
    $region2: #{tpu_custom_call.1} parent=1 // loop_pre_header
      _
    $region3: #{tpu_custom_call.1} parent=1 // loop_header
      %s16 = sphi 0, %s20
      %p17 = scmp.ge.s32.totalorder %s16, 4
      %s26 = sphi 0, %s28
      %s29 = sphi 0, %s26
      %s30 = sphi 0, %s29
      %s46 = sphi 0, %s30
      %s50 = sphi 0, %s50
      %s52 = sphi 0, %s50
      %s53 = sphi 0, %s52
      %s67 = sphi 0, %s53
      %s71 = sphi 0, %s71
      %s73 = sphi 0, %s71
      %s74 = sphi 0, %s73
      %s88 = sphi 0, %s74
      %s94 = sphi 0, %s96
      %s97 = sphi 0, %s94
      %s98 = sphi 0, %s97
      %s114 = sphi 0, %s98
    $region4: #{tpu_custom_call.1} parent=1 // loop_header_branch
      %19 = sbr.rel (%p17) target = $region8
    $region5: #{tpu_custom_call.1} parent=1 // loop_body
      %s21 = ssub.s32 %s16, 1
      %s22 = ssub.s32 %s16, 2
      %s23 = sadd.s32 %s16, 1
      %s24 = ssub.s32 %s16, %s23
      %p25 = scmp.eq.s32.totalorder %s24, 0
      %s27 = sadd.s32 %s26, 1
      %s28 = scalar_select %p25, %s26, %s27
      %p31 = pneg %p25
      %p32 = scmp.eq.s32.totalorder %s16, 1
      %p33 = por %p31, %p32
      %p34 = scmp.ne.s32.totalorder %s26, %s29
      %p35 = scmp.eq.s32.totalorder %s16, 0
      %p36 = por %p34, %p35
      %p37 = scmp.ne.s32.totalorder %s26, %s29
      %p38 = scmp.eq.s32.totalorder %s21, 1
      %p39 = por %p37, %p38
      %p40 = scmp.ne.s32.totalorder %s29, %s30
      %p41 = scmp.eq.s32.totalorder %s21, 0
      %p42 = por %p40, %p41
      %p43 = scmp.ne.s32.totalorder %s29, %s30
      %p44 = scmp.eq.s32.totalorder %s22, 1
      %p45 = por %p43, %p44
      %p47 = scmp.ne.s32.totalorder %s30, %s46
      %p48 = scmp.eq.s32.totalorder %s22, 0
      %p49 = por %p47, %p48
      %s51 = sadd.s32 %s50, 1
      %p54 = scmp.eq.s32.totalorder %s16, 1
      %p55 = scmp.ne.s32.totalorder %s50, %s52
      %p56 = scmp.eq.s32.totalorder %s16, 0
      %p57 = por %p55, %p56
      %p58 = scmp.ne.s32.totalorder %s50, %s52
      %p59 = scmp.eq.s32.totalorder %s21, 1
      %p60 = por %p58, %p59
      %p61 = scmp.ne.s32.totalorder %s52, %s53
      %p62 = scmp.eq.s32.totalorder %s21, 0
      %p63 = por %p61, %p62
      %p64 = scmp.ne.s32.totalorder %s52, %s53
      %p65 = scmp.eq.s32.totalorder %s22, 1
      %p66 = por %p64, %p65
      %p68 = scmp.ne.s32.totalorder %s53, %s67
      %p69 = scmp.eq.s32.totalorder %s22, 0
      %p70 = por %p68, %p69
      %s72 = sadd.s32 %s71, 1
      %p75 = scmp.eq.s32.totalorder %s16, 1
      %p76 = scmp.ne.s32.totalorder %s71, %s73
      %p77 = scmp.eq.s32.totalorder %s16, 0
      %p78 = por %p76, %p77
      %p79 = scmp.ne.s32.totalorder %s71, %s73
      %p80 = scmp.eq.s32.totalorder %s21, 1
      %p81 = por %p79, %p80
      %p82 = scmp.ne.s32.totalorder %s73, %s74
      %p83 = scmp.eq.s32.totalorder %s21, 0
      %p84 = por %p82, %p83
      %p85 = scmp.ne.s32.totalorder %s73, %s74
      %p86 = scmp.eq.s32.totalorder %s22, 1
      %p87 = por %p85, %p86
      %p89 = scmp.ne.s32.totalorder %s74, %s88
      %p90 = scmp.eq.s32.totalorder %s22, 0
      %p91 = por %p89, %p90
      %s92 = ssub.s32 %s16, %s23
      %p93 = scmp.eq.s32.totalorder %s92, 0
      %s95 = sadd.s32 %s94, 1
      %s96 = scalar_select %p93, %s94, %s95
      %p99 = pneg %p93
      %p100 = scmp.eq.s32.totalorder %s16, 1
      %p101 = por %p99, %p100
      %p102 = scmp.ne.s32.totalorder %s94, %s97
      %p103 = scmp.eq.s32.totalorder %s16, 0
      %p104 = por %p102, %p103
      %p105 = scmp.ne.s32.totalorder %s94, %s97
      %p106 = scmp.eq.s32.totalorder %s21, 1
      %p107 = por %p105, %p106
      %p108 = scmp.ne.s32.totalorder %s97, %s98
      %p109 = scmp.eq.s32.totalorder %s21, 0
      %p110 = por %p108, %p109
      %p111 = scmp.ne.s32.totalorder %s97, %s98
      %p112 = scmp.eq.s32.totalorder %s22, 1
      %p113 = por %p111, %p112
      %p115 = scmp.ne.s32.totalorder %s98, %s114
      %p116 = scmp.eq.s32.totalorder %s22, 0
      %p117 = por %p115, %p116
      %p118 = scmp.le.s32.totalorder 1, %s16
      %p119 = scmp.lt.s32.totalorder %s16, 3
      %p120 = pnand %p118, %p119
      %p121 = pneg %p120
      // Predicated region
      $region9: #{tpu_custom_call.1} parent=5 // pred_check
        _
      $region10: #{tpu_custom_call.1} parent=5 // pred_check_branch
        %123 = sbr.rel (%p120) target = $region12
      $region11: #{tpu_custom_call.1} parent=5 // pred_region
        %s124 = ssub.s32 %s16, 1
        // Predicated region
        $region13: #{tpu_custom_call.1} parent=11 // pred_check
          %p125 = pneg %p63
        $region14: #{tpu_custom_call.1} parent=11 // pred_check_branch
          %127 = sbr.rel (%p125) target = $region16
        $region15: #{tpu_custom_call.1} parent=11 // pred_region
          %s129 = ssub.s32 9216, 9216
          %130 = vsyncadd [#allocation6], %s129
          %s131 = sshll.u32 [#allocation5], 4
          %s132 = int_to_ptr.vmem [resolvable:$true] %s131
          %137 = dma.hbm_to_vmem [thread:$0]  %s1, 9216, %s132, [#allocation6], 128, 128, 8
        $region16: #{tpu_custom_call.1} parent=11 // pred_fallthru
          _
        // Predicated region
        $region17: #{tpu_custom_call.1} parent=11 // pred_check
          %p138 = pneg %p84
        $region18: #{tpu_custom_call.1} parent=11 // pred_check_branch
          %140 = sbr.rel (%p138) target = $region20
        $region19: #{tpu_custom_call.1} parent=11 // pred_region
          %s142 = ssub.s32 4096, 4096
          %143 = vsyncadd [#allocation6], %s142
          %s144 = sshll.u32 [#allocation7], 4
          %s145 = int_to_ptr.vmem [resolvable:$true] %s144
          %150 = dma.hbm_to_vmem [thread:$0]  %s2, 4096, %s145, [#allocation6], 128, 128, 8
        $region20: #{tpu_custom_call.1} parent=11 // pred_fallthru
          _
      $region12: #{tpu_custom_call.1} parent=5 // pred_fallthru
        _
      %p151 = scmp.lt.s32.totalorder %s16, 2
      // Predicated region
      $region21: #{tpu_custom_call.1} parent=5 // pred_check
        %p152 = pneg %p151
      $region22: #{tpu_custom_call.1} parent=5 // pred_check_branch
        %154 = sbr.rel (%p152) target = $region24
      $region23: #{tpu_custom_call.1} parent=5 // pred_region
        // Predicated region
        $region25: #{tpu_custom_call.1} parent=23 // pred_check
          %p155 = pneg %p36
        $region26: #{tpu_custom_call.1} parent=23 // pred_check_branch
          %157 = sbr.rel (%p155) target = $region28
        $region27: #{tpu_custom_call.1} parent=23 // pred_region
          %s158 = sand.u32 %s26, 1
          %s159 = scalar_lea.sflag [#allocation3], %s158
          %s160 = sand.u32 %s26, 1
          %s161 = smul.addr %s160, 2
          %s162 = scalar_lea.vmem [#allocation2], %s161
          %s164 = ssub.s32 32, 32
          %165 = vsyncadd %s159, %s164
          %s166 = smul.addr %s16, 2
          %s167 = smul.addr %s166, 16
          %s168 = scalar_lea.hbm %s0, %s167
          %s169 = sshll.u32 %s162, 4
          %s170 = int_to_ptr.vmem [resolvable:$true] %s169
          %175 = dma.hbm_to_vmem [thread:$0]  %s168, 32, %s170, %s159, 16, 16, 1
        $region28: #{tpu_custom_call.1} parent=23 // pred_fallthru
          _
      $region24: #{tpu_custom_call.1} parent=5 // pred_fallthru
        _
      %p176 = scmp.le.s32.totalorder 1, %s16
      %p177 = scmp.lt.s32.totalorder %s16, 3
      %p178 = pnand %p176, %p177
      %p179 = pneg %p178
      // Predicated region
      $region29: #{tpu_custom_call.1} parent=5 // pred_check
        _
      $region30: #{tpu_custom_call.1} parent=5 // pred_check_branch
        %181 = sbr.rel (%p178) target = $region32
      $region31: #{tpu_custom_call.1} parent=5 // pred_region
        %s182 = ssub.s32 %s16, 1
        %s183 = sand.u32 %s29, 1
        %s184 = scalar_lea.sflag [#allocation3], %s183
        %s185 = sand.u32 %s29, 1
        %s186 = smul.addr %s185, 2
        %s187 = scalar_lea.vmem [#allocation2], %s186
        // Predicated region
        $region33: #{tpu_custom_call.1} parent=31 // pred_check
          %p188 = pneg %p42
        $region34: #{tpu_custom_call.1} parent=31 // pred_check_branch
          %190 = sbr.rel (%p188) target = $region36
        $region35: #{tpu_custom_call.1} parent=31 // pred_region
          %191 = dma.done %s184, 32
        $region36: #{tpu_custom_call.1} parent=31 // pred_fallthru
          _
        // Predicated region
        $region37: #{tpu_custom_call.1} parent=31 // pred_check
          %p192 = pneg %p63
        $region38: #{tpu_custom_call.1} parent=31 // pred_check_branch
          %194 = sbr.rel (%p192) target = $region40
        $region39: #{tpu_custom_call.1} parent=31 // pred_region
          %195 = dma.done [#allocation6], 9216
        $region40: #{tpu_custom_call.1} parent=31 // pred_fallthru
          _
        // Predicated region
        $region41: #{tpu_custom_call.1} parent=31 // pred_check
          %p196 = pneg %p84
        $region42: #{tpu_custom_call.1} parent=31 // pred_check_branch
          %198 = sbr.rel (%p196) target = $region44
        $region43: #{tpu_custom_call.1} parent=31 // pred_region
          %199 = dma.done [#allocation6], 4096
        $region44: #{tpu_custom_call.1} parent=31 // pred_fallthru
          _
        %s200 = sand.u32 %s29, 1
        %s201 = scalar_lea.sflag [#allocation3], %s200
        %s202 = sand.u32 %s29, 1
        %s203 = smul.addr %s202, 2
        %s204 = scalar_lea.vmem [#allocation2], %s203
        %p205 = pneg %p42
        %p206 = pneg %p39
        %p207 = pneg %p63
        %p208 = pneg %p60
        %p209 = pneg %p84
        %p210 = pneg %p81
        %p211 = pneg %p110
        %p212 = pneg %p107
        %s213 = sand.u32 %s97, 1
        %s214 = scalar_lea.sflag [#allocation4], %s213
        %s215 = sand.u32 %s97, 1
        %s216 = smul.addr %s215, 128
        %s217 = scalar_lea.vmem [#allocation8], %s216
        %v219 = vld [vmem:[%s187] sm:$0x1]
        %v220 = vld [vmem:[%s187 + $0x1] sm:$0x1]
        %v224 = vunpack.c.l.s4 1966171168
        %v225 = vunpack.c.0.s8 %v224
        %v226 = vlaneseq
        %v227 = vshrl.u32 %v226, 7
        %v228 = vsub.s32 %v225, %v227
        %v229 = vrot.slane %v220, %v228
        %v231 = vunpack.c.l.s4 1966171168
        %v232 = vunpack.c.0.s8 %v231
        %v233 = vlaneseq
        %v234 = vshrl.u32 %v233, 7
        %v235 = vsub.s32 %v232, %v234
        %v236 = vrot.slane %v229, %v235
        %v238 = vunpack.c.l.s4 1966171168
        %v239 = vunpack.c.0.s8 %v238
        %v240 = vlaneseq
        %v241 = vshrl.u32 %v240, 7
        %v242 = vsub.s32 %v239, %v241
        %v243 = vrot.slane %v219, %v242
        %v245 = vunpack.c.l.s4 1966171168
        %v246 = vunpack.c.0.s8 %v245
        %v247 = vlaneseq
        %v248 = vshrl.u32 %v247, 7
        %v249 = vsub.s32 %v246, %v248
        %v250 = vrot.slane %v243, %v249
        %v252 = vshrl.u32 %v236, 16
        %v255 = vshrl.u32 %v250, 16
        %v259 = vrot.slane %v252, 7
        %v260 = vshll.u32 %v236, 16
        %v262 = vor.u32 %v259, %v260
        %v263 = vrot.slane %v255, 7
        %v264 = vshll.u32 %v250, 16
        %v266 = vor.u32 %v263, %v264
        %v269 = vrot.slane %v260, 7
        %v270 = vrot.slane %v264, 7
        %vm273 = vcmask 1040384
        %vm274 = vsmask.f32 256
        %vm275 = vmand %vm273, %vm274
        %v276 = vsel %vm275, %v252, %v262
        %v277 = vsel %vm275, %v255, %v266
        %vm278 = vcmask 1041408
        %vm279 = vsmask.f32 1280
        %vm280 = vmand %vm278, %vm279
        %v281 = vsel %vm280, %v276, %v269
        %v282 = vsel %vm280, %v277, %v270
        %v286 = vunpack.c.l.s4 1966171168
        %v287 = vunpack.c.0.s8 %v286
        %v288 = vlaneseq
        %v289 = vshrl.u32 %v288, 7
        %v290 = vsub.s32 %v287, %v289
        %v291 = vrot.slane %v281, %v290
        %v292 = vcombine.high %v291, %v291
        %v294 = vunpack.c.l.s4 1966171168
        %v295 = vunpack.c.0.s8 %v294
        %v296 = vlaneseq
        %v297 = vshrl.u32 %v296, 7
        %v298 = vsub.s32 %v295, %v297
        %v299 = vrot.slane %v291, %v298
        %v301 = vunpack.c.l.s4 1966171168
        %v302 = vunpack.c.0.s8 %v301
        %v303 = vlaneseq
        %v304 = vshrl.u32 %v303, 7
        %v305 = vsub.s32 %v302, %v304
        %v306 = vrot.slane %v292, %v305
        %v308 = vunpack.c.l.s4 1966171168
        %v309 = vunpack.c.0.s8 %v308
        %v310 = vlaneseq
        %v311 = vshrl.u32 %v310, 7
        %v312 = vsub.s32 %v309, %v311
        %v313 = vrot.slane %v282, %v312
        %v314 = vcombine.high %v313, %v313
        %v316 = vunpack.c.l.s4 1966171168
        %v317 = vunpack.c.0.s8 %v316
        %v318 = vlaneseq
        %v319 = vshrl.u32 %v318, 7
        %v320 = vsub.s32 %v317, %v319
        %v321 = vrot.slane %v313, %v320
        %v323 = vunpack.c.l.s4 1966171168
        %v324 = vunpack.c.0.s8 %v323
        %v325 = vlaneseq
        %v326 = vshrl.u32 %v325, 7
        %v327 = vsub.s32 %v324, %v326
        %v328 = vrot.slane %v314, %v327
        %vm329 = vsmask.f32 1284
        %vm330 = vmor %vm274, %vm329
        %vm331 = vsmask.f32 2312
        %vm332 = vmor %vm330, %vm331
        %vm333 = vsmask.f32 3340
        %vm334 = vmor %vm332, %vm333
        %vm335 = vsmask.f32 4368
        %vm336 = vmor %vm334, %vm335
        %vm337 = vsmask.f32 5396
        %vm338 = vmor %vm336, %vm337
        %vm339 = vsmask.f32 6424
        %vm340 = vmor %vm338, %vm339
        %vm341 = vsmask.f32 7452
        %vm342 = vmor %vm340, %vm341
        %v344 = vshrl.u32 %v299, 16
        %v346 = vrot.slane %v344, 7
        %v347 = vrot.slane %v346, 1
        %v349 = vshll.u32 %v306, 16
        %v351 = vsel %vm342, %v347, %v349
        %v353 = vshrl.u32 %v321, 16
        %v355 = vrot.slane %v353, 7
        %v356 = vrot.slane %v355, 1
        %v358 = vshll.u32 %v328, 16
        %v360 = vsel %vm342, %v356, %v358
        %v361 = vcombine.low %v281, %v282
        %v363 = vunpack.c.l.s4 1966171168
        %v364 = vunpack.c.0.s8 %v363
        %v365 = vlaneseq
        %v366 = vshrl.u32 %v365, 7
        %v367 = vsub.s32 %v364, %v366
        %v368 = vrot.slane %v361, %v367
        %v370 = vunpack.c.l.s4 1966171168
        %v371 = vunpack.c.0.s8 %v370
        %v372 = vlaneseq
        %v373 = vshrl.u32 %v372, 7
        %v374 = vsub.s32 %v371, %v373
        %v375 = vrot.slane %v368, %v374
        %v376 = vcombine.low %v351, %v360
        %v378 = vunpack.c.l.s4 1966171168
        %v379 = vunpack.c.0.s8 %v378
        %v380 = vlaneseq
        %v381 = vshrl.u32 %v380, 7
        %v382 = vsub.s32 %v379, %v381
        %v383 = vrot.slane %v376, %v382
        %v385 = vunpack.c.l.s4 1966171168
        %v386 = vunpack.c.0.s8 %v385
        %v387 = vlaneseq
        %v388 = vshrl.u32 %v387, 7
        %v389 = vsub.s32 %v386, %v388
        %v390 = vrot.slane %v383, %v389
        %391 = vrot.lane.b32.xlu0 %v390, 64
        %v392 = vpop.permute.xlu0 %391
        %v393 = vcombine.low %v306, %v328
        %v395 = vunpack.c.l.s4 1966171168
        %v396 = vunpack.c.0.s8 %v395
        %v397 = vlaneseq
        %v398 = vshrl.u32 %v397, 7
        %v399 = vsub.s32 %v396, %v398
        %v400 = vrot.slane %v393, %v399
        %v402 = vunpack.c.l.s4 1966171168
        %v403 = vunpack.c.0.s8 %v402
        %v404 = vlaneseq
        %v405 = vshrl.u32 %v404, 7
        %v406 = vsub.s32 %v403, %v405
        %v407 = vrot.slane %v400, %v406
        %v408 = vcombine.low %v282, %v281
        %v410 = vunpack.c.l.s4 1966171168
        %v411 = vunpack.c.0.s8 %v410
        %v412 = vlaneseq
        %v413 = vshrl.u32 %v412, 7
        %v414 = vsub.s32 %v411, %v413
        %v415 = vrot.slane %v408, %v414
        %v417 = vunpack.c.l.s4 1966171168
        %v418 = vunpack.c.0.s8 %v417
        %v419 = vlaneseq
        %v420 = vshrl.u32 %v419, 7
        %v421 = vsub.s32 %v418, %v420
        %v422 = vrot.slane %v415, %v421
        %423 = vrot.lane.b32.xlu0 %v422, 64
        %v424 = vpop.permute.xlu0 %423
        %v425 = vcombine.low %v360, %v351
        %v427 = vunpack.c.l.s4 1966171168
        %v428 = vunpack.c.0.s8 %v427
        %v429 = vlaneseq
        %v430 = vshrl.u32 %v429, 7
        %v431 = vsub.s32 %v428, %v430
        %v432 = vrot.slane %v425, %v431
        %v434 = vunpack.c.l.s4 1966171168
        %v435 = vunpack.c.0.s8 %v434
        %v436 = vlaneseq
        %v437 = vshrl.u32 %v436, 7
        %v438 = vsub.s32 %v435, %v437
        %v439 = vrot.slane %v432, %v438
        %v440 = vcombine.low %v328, %v306
        %v442 = vunpack.c.l.s4 1966171168
        %v443 = vunpack.c.0.s8 %v442
        %v444 = vlaneseq
        %v445 = vshrl.u32 %v444, 7
        %v446 = vsub.s32 %v443, %v445
        %v447 = vrot.slane %v440, %v446
        %v449 = vunpack.c.l.s4 1966171168
        %v450 = vunpack.c.0.s8 %v449
        %v451 = vlaneseq
        %v452 = vshrl.u32 %v451, 7
        %v453 = vsub.s32 %v450, %v452
        %v454 = vrot.slane %v447, %v453
        %455 = vrot.lane.b32.xlu0 %v454, 64
        %v456 = vpop.permute.xlu0 %455
        %vm457 = vcmask 523264
        %v460 = vsel %vm457, %v375, %v392
        %v464 = vsel %vm457, %v407, %v424
        %v468 = vsel %vm457, %v439, %v456
        %v470 = vld [vmem:[#allocation5] sm:$0xff]
        %v471 = vld [vmem:[#allocation5 + $0x8] sm:$0xff]
        %v472 = vld [vmem:[#allocation5 + $0x10] sm:$0xff]
        %v473 = vld [vmem:[#allocation5 + $0x18] sm:$0xff]
        %v474 = vld [vmem:[#allocation5 + $0x20] sm:$0xff]
        %v475 = vld [vmem:[#allocation5 + $0x28] sm:$0xff]
        %v476 = vld [vmem:[#allocation5 + $0x30] sm:$0xff]
        %v477 = vld [vmem:[#allocation5 + $0x38] sm:$0xff]
        %v478 = vld [vmem:[#allocation5 + $0x40] sm:$0xff]
        %v479 = vld [vmem:[#allocation5 + $0x48] sm:$0xff]
        %v480 = vld [vmem:[#allocation5 + $0x50] sm:$0xff]
        %v481 = vld [vmem:[#allocation5 + $0x58] sm:$0xff]
        %v482 = vld [vmem:[#allocation5 + $0x60] sm:$0xff]
        %v483 = vld [vmem:[#allocation5 + $0x68] sm:$0xff]
        %v484 = vld [vmem:[#allocation5 + $0x70] sm:$0xff]
        %v485 = vld [vmem:[#allocation5 + $0x78] sm:$0xff]
        %v486 = vld [vmem:[#allocation5 + $0x80] sm:$0xff]
        %v487 = vld [vmem:[#allocation5 + $0x88] sm:$0xff]
        %v488 = vld [vmem:[#allocation5 + $0x90] sm:$0xff]
        %v489 = vld [vmem:[#allocation5 + $0x98] sm:$0xff]
        %v490 = vld [vmem:[#allocation5 + $0xa0] sm:$0xff]
        %v491 = vld [vmem:[#allocation5 + $0xa8] sm:$0xff]
        %v492 = vld [vmem:[#allocation5 + $0xb0] sm:$0xff]
        %v493 = vld [vmem:[#allocation5 + $0xb8] sm:$0xff]
        %v494 = vld [vmem:[#allocation5 + $0xc0] sm:$0xff]
        %v495 = vld [vmem:[#allocation5 + $0xc8] sm:$0xff]
        %v496 = vld [vmem:[#allocation5 + $0xd0] sm:$0xff]
        %v497 = vld [vmem:[#allocation5 + $0xd8] sm:$0xff]
        %v498 = vld [vmem:[#allocation5 + $0xe0] sm:$0xff]
        %v499 = vld [vmem:[#allocation5 + $0xe8] sm:$0xff]
        %v500 = vld [vmem:[#allocation5 + $0xf0] sm:$0xff]
        %v501 = vld [vmem:[#allocation5 + $0xf8] sm:$0xff]
        %v502 = vld [vmem:[#allocation5 + $0x100] sm:$0xff]
        %v503 = vld [vmem:[#allocation5 + $0x108] sm:$0xff]
        %v504 = vld [vmem:[#allocation5 + $0x110] sm:$0xff]
        %v505 = vld [vmem:[#allocation5 + $0x118] sm:$0xff]
        %v506 = vld [vmem:[#allocation5 + $0x120] sm:$0xff]
        %v507 = vld [vmem:[#allocation5 + $0x128] sm:$0xff]
        %v508 = vld [vmem:[#allocation5 + $0x130] sm:$0xff]
        %v509 = vld [vmem:[#allocation5 + $0x138] sm:$0xff]
        %v510 = vld [vmem:[#allocation5 + $0x140] sm:$0xff]
        %v511 = vld [vmem:[#allocation5 + $0x148] sm:$0xff]
        %v512 = vld [vmem:[#allocation5 + $0x150] sm:$0xff]
        %v513 = vld [vmem:[#allocation5 + $0x158] sm:$0xff]
        %v514 = vld [vmem:[#allocation5 + $0x160] sm:$0xff]
        %v515 = vld [vmem:[#allocation5 + $0x168] sm:$0xff]
        %v516 = vld [vmem:[#allocation5 + $0x170] sm:$0xff]
        %v517 = vld [vmem:[#allocation5 + $0x178] sm:$0xff]
        %v518 = vld [vmem:[#allocation5 + $0x180] sm:$0xff]
        %v519 = vld [vmem:[#allocation5 + $0x188] sm:$0xff]
        %v520 = vld [vmem:[#allocation5 + $0x190] sm:$0xff]
        %v521 = vld [vmem:[#allocation5 + $0x198] sm:$0xff]
        %v522 = vld [vmem:[#allocation5 + $0x1a0] sm:$0xff]
        %v523 = vld [vmem:[#allocation5 + $0x1a8] sm:$0xff]
        %v524 = vld [vmem:[#allocation5 + $0x1b0] sm:$0xff]
        %v525 = vld [vmem:[#allocation5 + $0x1b8] sm:$0xff]
        %v526 = vld [vmem:[#allocation5 + $0x1c0] sm:$0xff]
        %v527 = vld [vmem:[#allocation5 + $0x1c8] sm:$0xff]
        %v528 = vld [vmem:[#allocation5 + $0x1d0] sm:$0xff]
        %v529 = vld [vmem:[#allocation5 + $0x1d8] sm:$0xff]
        %v530 = vld [vmem:[#allocation5 + $0x1e0] sm:$0xff]
        %v531 = vld [vmem:[#allocation5 + $0x1e8] sm:$0xff]
        %v532 = vld [vmem:[#allocation5 + $0x1f0] sm:$0xff]
        %v533 = vld [vmem:[#allocation5 + $0x1f8] sm:$0xff]
        %v534 = vld [vmem:[#allocation5 + $0x200] sm:$0xff]
        %v535 = vld [vmem:[#allocation5 + $0x208] sm:$0xff]
        %v536 = vld [vmem:[#allocation5 + $0x210] sm:$0xff]
        %v537 = vld [vmem:[#allocation5 + $0x218] sm:$0xff]
        %v538 = vld [vmem:[#allocation5 + $0x220] sm:$0xff]
        %v539 = vld [vmem:[#allocation5 + $0x228] sm:$0xff]
        %v540 = vld [vmem:[#allocation5 + $0x230] sm:$0xff]
        %v541 = vld [vmem:[#allocation5 + $0x238] sm:$0xff]
        %v542 = vld [vmem:[#allocation7] sm:$0xff]
        %v543 = vld [vmem:[#allocation7 + $0x8] sm:$0xff]
        %v544 = vld [vmem:[#allocation7 + $0x10] sm:$0xff]
        %v545 = vld [vmem:[#allocation7 + $0x18] sm:$0xff]
        %v546 = vld [vmem:[#allocation7 + $0x20] sm:$0xff]
        %v547 = vld [vmem:[#allocation7 + $0x28] sm:$0xff]
        %v548 = vld [vmem:[#allocation7 + $0x30] sm:$0xff]
        %v549 = vld [vmem:[#allocation7 + $0x38] sm:$0xff]
        %v550 = vld [vmem:[#allocation7 + $0x40] sm:$0xff]
        %v551 = vld [vmem:[#allocation7 + $0x48] sm:$0xff]
        %v552 = vld [vmem:[#allocation7 + $0x50] sm:$0xff]
        %v553 = vld [vmem:[#allocation7 + $0x58] sm:$0xff]
        %v554 = vld [vmem:[#allocation7 + $0x60] sm:$0xff]
        %v555 = vld [vmem:[#allocation7 + $0x68] sm:$0xff]
        %v556 = vld [vmem:[#allocation7 + $0x70] sm:$0xff]
        %v557 = vld [vmem:[#allocation7 + $0x78] sm:$0xff]
        %v558 = vld [vmem:[#allocation7 + $0x80] sm:$0xff]
        %v559 = vld [vmem:[#allocation7 + $0x88] sm:$0xff]
        %v560 = vld [vmem:[#allocation7 + $0x90] sm:$0xff]
        %v561 = vld [vmem:[#allocation7 + $0x98] sm:$0xff]
        %v562 = vld [vmem:[#allocation7 + $0xa0] sm:$0xff]
        %v563 = vld [vmem:[#allocation7 + $0xa8] sm:$0xff]
        %v564 = vld [vmem:[#allocation7 + $0xb0] sm:$0xff]
        %v565 = vld [vmem:[#allocation7 + $0xb8] sm:$0xff]
        %v566 = vld [vmem:[#allocation7 + $0xc0] sm:$0xff]
        %v567 = vld [vmem:[#allocation7 + $0xc8] sm:$0xff]
        %v568 = vld [vmem:[#allocation7 + $0xd0] sm:$0xff]
        %v569 = vld [vmem:[#allocation7 + $0xd8] sm:$0xff]
        %v570 = vld [vmem:[#allocation7 + $0xe0] sm:$0xff]
        %v571 = vld [vmem:[#allocation7 + $0xe8] sm:$0xff]
        %v572 = vld [vmem:[#allocation7 + $0xf0] sm:$0xff]
        %v573 = vld [vmem:[#allocation7 + $0xf8] sm:$0xff]
        %575 = vset.pattern.permute.xlu0 0
        %576 = vperm.xlu0 %575, %v542
        %v577 = vpop.permute.xlu0 %576
        %580 = vset.pattern.permute.xlu0 0
        %581 = vperm.xlu0 %580, %v543
        %v582 = vpop.permute.xlu0 %581
        %585 = vset.pattern.permute.xlu0 0
        %586 = vperm.xlu0 %585, %v544
        %v587 = vpop.permute.xlu0 %586
        %590 = vset.pattern.permute.xlu0 0
        %591 = vperm.xlu0 %590, %v545
        %v592 = vpop.permute.xlu0 %591
        %595 = vset.pattern.permute.xlu0 0
        %596 = vperm.xlu0 %595, %v546
        %v597 = vpop.permute.xlu0 %596
        %600 = vset.pattern.permute.xlu0 0
        %601 = vperm.xlu0 %600, %v547
        %v602 = vpop.permute.xlu0 %601
        %605 = vset.pattern.permute.xlu0 0
        %606 = vperm.xlu0 %605, %v548
        %v607 = vpop.permute.xlu0 %606
        %610 = vset.pattern.permute.xlu0 0
        %611 = vperm.xlu0 %610, %v549
        %v612 = vpop.permute.xlu0 %611
        %615 = vset.pattern.permute.xlu0 0
        %616 = vperm.xlu0 %615, %v550
        %v617 = vpop.permute.xlu0 %616
        %620 = vset.pattern.permute.xlu0 0
        %621 = vperm.xlu0 %620, %v551
        %v622 = vpop.permute.xlu0 %621
        %625 = vset.pattern.permute.xlu0 0
        %626 = vperm.xlu0 %625, %v552
        %v627 = vpop.permute.xlu0 %626
        %630 = vset.pattern.permute.xlu0 0
        %631 = vperm.xlu0 %630, %v553
        %v632 = vpop.permute.xlu0 %631
        %635 = vset.pattern.permute.xlu0 0
        %636 = vperm.xlu0 %635, %v554
        %v637 = vpop.permute.xlu0 %636
        %640 = vset.pattern.permute.xlu0 0
        %641 = vperm.xlu0 %640, %v555
        %v642 = vpop.permute.xlu0 %641
        %645 = vset.pattern.permute.xlu0 0
        %646 = vperm.xlu0 %645, %v556
        %v647 = vpop.permute.xlu0 %646
        %650 = vset.pattern.permute.xlu0 0
        %651 = vperm.xlu0 %650, %v557
        %v652 = vpop.permute.xlu0 %651
        %655 = vset.pattern.permute.xlu0 0
        %656 = vperm.xlu0 %655, %v558
        %v657 = vpop.permute.xlu0 %656
        %660 = vset.pattern.permute.xlu0 0
        %661 = vperm.xlu0 %660, %v559
        %v662 = vpop.permute.xlu0 %661
        %665 = vset.pattern.permute.xlu0 0
        %666 = vperm.xlu0 %665, %v560
        %v667 = vpop.permute.xlu0 %666
        %670 = vset.pattern.permute.xlu0 0
        %671 = vperm.xlu0 %670, %v561
        %v672 = vpop.permute.xlu0 %671
        %675 = vset.pattern.permute.xlu0 0
        %676 = vperm.xlu0 %675, %v562
        %v677 = vpop.permute.xlu0 %676
        %680 = vset.pattern.permute.xlu0 0
        %681 = vperm.xlu0 %680, %v563
        %v682 = vpop.permute.xlu0 %681
        %685 = vset.pattern.permute.xlu0 0
        %686 = vperm.xlu0 %685, %v564
        %v687 = vpop.permute.xlu0 %686
        %690 = vset.pattern.permute.xlu0 0
        %691 = vperm.xlu0 %690, %v565
        %v692 = vpop.permute.xlu0 %691
        %695 = vset.pattern.permute.xlu0 0
        %696 = vperm.xlu0 %695, %v566
        %v697 = vpop.permute.xlu0 %696
        %700 = vset.pattern.permute.xlu0 0
        %701 = vperm.xlu0 %700, %v567
        %v702 = vpop.permute.xlu0 %701
        %705 = vset.pattern.permute.xlu0 0
        %706 = vperm.xlu0 %705, %v568
        %v707 = vpop.permute.xlu0 %706
        %710 = vset.pattern.permute.xlu0 0
        %711 = vperm.xlu0 %710, %v569
        %v712 = vpop.permute.xlu0 %711
        %715 = vset.pattern.permute.xlu0 0
        %716 = vperm.xlu0 %715, %v570
        %v717 = vpop.permute.xlu0 %716
        %720 = vset.pattern.permute.xlu0 0
        %721 = vperm.xlu0 %720, %v571
        %v722 = vpop.permute.xlu0 %721
        %725 = vset.pattern.permute.xlu0 0
        %726 = vperm.xlu0 %725, %v572
        %v727 = vpop.permute.xlu0 %726
        %730 = vset.pattern.permute.xlu0 0
        %731 = vperm.xlu0 %730, %v573
        %v732 = vpop.permute.xlu0 %731
        %v806 = vunpack.c.l.b16 %v470
        %v807 = vunpack.c.h.b16 %v470
        %v808 = vunpack.c.l.b16 %v471
        %v809 = vunpack.c.h.b16 %v471
        %v810 = vunpack.c.l.b16 %v472
        %v811 = vunpack.c.h.b16 %v472
        %v812 = vunpack.c.l.b16 %v473
        %v813 = vunpack.c.h.b16 %v473
        %v814 = vunpack.c.l.b16 %v474
        %v815 = vunpack.c.h.b16 %v474
        %v816 = vunpack.c.l.b16 %v475
        %v817 = vunpack.c.h.b16 %v475
        %v818 = vunpack.c.l.b16 %v476
        %v819 = vunpack.c.h.b16 %v476
        %v820 = vunpack.c.l.b16 %v477
        %v821 = vunpack.c.h.b16 %v477
        %v822 = vunpack.c.l.b16 %v478
        %v823 = vunpack.c.h.b16 %v478
        %v824 = vunpack.c.l.b16 %v479
        %v825 = vunpack.c.h.b16 %v479
        %v826 = vunpack.c.l.b16 %v480
        %v827 = vunpack.c.h.b16 %v480
        %v828 = vunpack.c.l.b16 %v481
        %v829 = vunpack.c.h.b16 %v481
        %v830 = vunpack.c.l.b16 %v482
        %v831 = vunpack.c.h.b16 %v482
        %v832 = vunpack.c.l.b16 %v483
        %v833 = vunpack.c.h.b16 %v483
        %v834 = vunpack.c.l.b16 %v484
        %v835 = vunpack.c.h.b16 %v484
        %v836 = vunpack.c.l.b16 %v485
        %v837 = vunpack.c.h.b16 %v485
        %v838 = vunpack.c.l.b16 %v486
        %v839 = vunpack.c.h.b16 %v486
        %v840 = vunpack.c.l.b16 %v487
        %v841 = vunpack.c.h.b16 %v487
        %v842 = vunpack.c.l.b16 %v488
        %v843 = vunpack.c.h.b16 %v488
        %v844 = vunpack.c.l.b16 %v489
        %v845 = vunpack.c.h.b16 %v489
        %v846 = vunpack.c.l.b16 %v490
        %v847 = vunpack.c.h.b16 %v490
        %v848 = vunpack.c.l.b16 %v491
        %v849 = vunpack.c.h.b16 %v491
        %v850 = vunpack.c.l.b16 %v492
        %v851 = vunpack.c.h.b16 %v492
        %v852 = vunpack.c.l.b16 %v493
        %v853 = vunpack.c.h.b16 %v493
        %v854 = vunpack.c.l.b16 %v494
        %v855 = vunpack.c.h.b16 %v494
        %v856 = vunpack.c.l.b16 %v495
        %v857 = vunpack.c.h.b16 %v495
        %v858 = vunpack.c.l.b16 %v496
        %v859 = vunpack.c.h.b16 %v496
        %v860 = vunpack.c.l.b16 %v497
        %v861 = vunpack.c.h.b16 %v497
        %v862 = vunpack.c.l.b16 %v498
        %v863 = vunpack.c.h.b16 %v498
        %v864 = vunpack.c.l.b16 %v499
        %v865 = vunpack.c.h.b16 %v499
        %v866 = vunpack.c.l.b16 %v500
        %v867 = vunpack.c.h.b16 %v500
        %v868 = vunpack.c.l.b16 %v501
        %v869 = vunpack.c.h.b16 %v501
        %v870 = vunpack.c.l.b16 %v502
        %v871 = vunpack.c.h.b16 %v502
        %v872 = vunpack.c.l.b16 %v503
        %v873 = vunpack.c.h.b16 %v503
        %v874 = vunpack.c.l.b16 %v504
        %v875 = vunpack.c.h.b16 %v504
        %v876 = vunpack.c.l.b16 %v505
        %v877 = vunpack.c.h.b16 %v505
        %v878 = vunpack.c.l.b16 %v506
        %v879 = vunpack.c.h.b16 %v506
        %v880 = vunpack.c.l.b16 %v507
        %v881 = vunpack.c.h.b16 %v507
        %v882 = vunpack.c.l.b16 %v508
        %v883 = vunpack.c.h.b16 %v508
        %v884 = vunpack.c.l.b16 %v509
        %v885 = vunpack.c.h.b16 %v509
        %v886 = vunpack.c.l.b16 %v510
        %v887 = vunpack.c.h.b16 %v510
        %v888 = vunpack.c.l.b16 %v511
        %v889 = vunpack.c.h.b16 %v511
        %v890 = vunpack.c.l.b16 %v512
        %v891 = vunpack.c.h.b16 %v512
        %v892 = vunpack.c.l.b16 %v513
        %v893 = vunpack.c.h.b16 %v513
        %v894 = vunpack.c.l.b16 %v514
        %v895 = vunpack.c.h.b16 %v514
        %v896 = vunpack.c.l.b16 %v515
        %v897 = vunpack.c.h.b16 %v515
        %v898 = vunpack.c.l.b16 %v516
        %v899 = vunpack.c.h.b16 %v516
        %v900 = vunpack.c.l.b16 %v517
        %v901 = vunpack.c.h.b16 %v517
        %v902 = vunpack.c.l.b16 %v518
        %v903 = vunpack.c.h.b16 %v518
        %v904 = vunpack.c.l.b16 %v519
        %v905 = vunpack.c.h.b16 %v519
        %v906 = vunpack.c.l.b16 %v520
        %v907 = vunpack.c.h.b16 %v520
        %v908 = vunpack.c.l.b16 %v521
        %v909 = vunpack.c.h.b16 %v521
        %v910 = vunpack.c.l.b16 %v522
        %v911 = vunpack.c.h.b16 %v522
        %v912 = vunpack.c.l.b16 %v523
        %v913 = vunpack.c.h.b16 %v523
        %v914 = vunpack.c.l.b16 %v524
        %v915 = vunpack.c.h.b16 %v524
        %v916 = vunpack.c.l.b16 %v525
        %v917 = vunpack.c.h.b16 %v525
        %v918 = vunpack.c.l.b16 %v526
        %v919 = vunpack.c.h.b16 %v526
        %v920 = vunpack.c.l.b16 %v527
        %v921 = vunpack.c.h.b16 %v527
        %v922 = vunpack.c.l.b16 %v528
        %v923 = vunpack.c.h.b16 %v528
        %v924 = vunpack.c.l.b16 %v529
        %v925 = vunpack.c.h.b16 %v529
        %v926 = vunpack.c.l.b16 %v530
        %v927 = vunpack.c.h.b16 %v530
        %v928 = vunpack.c.l.b16 %v531
        %v929 = vunpack.c.h.b16 %v531
        %v930 = vunpack.c.l.b16 %v532
        %v931 = vunpack.c.h.b16 %v532
        %v932 = vunpack.c.l.b16 %v533
        %v933 = vunpack.c.h.b16 %v533
        %v934 = vunpack.c.l.b16 %v534
        %v935 = vunpack.c.h.b16 %v534
        %v936 = vunpack.c.l.b16 %v535
        %v937 = vunpack.c.h.b16 %v535
        %v938 = vunpack.c.l.b16 %v536
        %v939 = vunpack.c.h.b16 %v536
        %v940 = vunpack.c.l.b16 %v537
        %v941 = vunpack.c.h.b16 %v537
        %v942 = vunpack.c.l.b16 %v538
        %v943 = vunpack.c.h.b16 %v538
        %v944 = vunpack.c.l.b16 %v539
        %v945 = vunpack.c.h.b16 %v539
        %v946 = vunpack.c.l.b16 %v540
        %v947 = vunpack.c.h.b16 %v540
        %v948 = vunpack.c.l.b16 %v541
        %v949 = vunpack.c.h.b16 %v541
        %v950 = vpack.c.b16 %v808, %v806
        %v951 = vpack.c.b16 %v809, %v807
        %v952 = vpack.c.b16 %v812, %v810
        %v953 = vpack.c.b16 %v813, %v811
        %v954 = vpack.c.b16 %v816, %v814
        %v955 = vpack.c.b16 %v817, %v815
        %v956 = vpack.c.b16 %v820, %v818
        %v957 = vpack.c.b16 %v821, %v819
        %v958 = vpack.c.b16 %v824, %v822
        %v959 = vpack.c.b16 %v825, %v823
        %v960 = vpack.c.b16 %v828, %v826
        %v961 = vpack.c.b16 %v829, %v827
        %v962 = vpack.c.b16 %v832, %v830
        %v963 = vpack.c.b16 %v833, %v831
        %v964 = vpack.c.b16 %v836, %v834
        %v965 = vpack.c.b16 %v837, %v835
        %v966 = vpack.c.b16 %v840, %v838
        %v967 = vpack.c.b16 %v841, %v839
        %v968 = vpack.c.b16 %v844, %v842
        %v969 = vpack.c.b16 %v845, %v843
        %v970 = vpack.c.b16 %v848, %v846
        %v971 = vpack.c.b16 %v849, %v847
        %v972 = vpack.c.b16 %v852, %v850
        %v973 = vpack.c.b16 %v853, %v851
        %v974 = vpack.c.b16 %v856, %v854
        %v975 = vpack.c.b16 %v857, %v855
        %v976 = vpack.c.b16 %v860, %v858
        %v977 = vpack.c.b16 %v861, %v859
        %v978 = vpack.c.b16 %v864, %v862
        %v979 = vpack.c.b16 %v865, %v863
        %v980 = vpack.c.b16 %v868, %v866
        %v981 = vpack.c.b16 %v869, %v867
        %v982 = vpack.c.b16 %v872, %v870
        %v983 = vpack.c.b16 %v873, %v871
        %v984 = vpack.c.b16 %v876, %v874
        %v985 = vpack.c.b16 %v877, %v875
        %v986 = vpack.c.b16 %v880, %v878
        %v987 = vpack.c.b16 %v881, %v879
        %v988 = vpack.c.b16 %v884, %v882
        %v989 = vpack.c.b16 %v885, %v883
        %v990 = vpack.c.b16 %v888, %v886
        %v991 = vpack.c.b16 %v889, %v887
        %v992 = vpack.c.b16 %v892, %v890
        %v993 = vpack.c.b16 %v893, %v891
        %v994 = vpack.c.b16 %v896, %v894
        %v995 = vpack.c.b16 %v897, %v895
        %v996 = vpack.c.b16 %v900, %v898
        %v997 = vpack.c.b16 %v901, %v899
        %v998 = vpack.c.b16 %v904, %v902
        %v999 = vpack.c.b16 %v905, %v903
        %v1000 = vpack.c.b16 %v908, %v906
        %v1001 = vpack.c.b16 %v909, %v907
        %v1002 = vpack.c.b16 %v912, %v910
        %v1003 = vpack.c.b16 %v913, %v911
        %v1004 = vpack.c.b16 %v916, %v914
        %v1005 = vpack.c.b16 %v917, %v915
        %v1006 = vpack.c.b16 %v920, %v918
        %v1007 = vpack.c.b16 %v921, %v919
        %v1008 = vpack.c.b16 %v924, %v922
        %v1009 = vpack.c.b16 %v925, %v923
        %v1010 = vpack.c.b16 %v928, %v926
        %v1011 = vpack.c.b16 %v929, %v927
        %v1012 = vpack.c.b16 %v932, %v930
        %v1013 = vpack.c.b16 %v933, %v931
        %v1014 = vpack.c.b16 %v936, %v934
        %v1015 = vpack.c.b16 %v937, %v935
        %v1016 = vpack.c.b16 %v940, %v938
        %v1017 = vpack.c.b16 %v941, %v939
        %v1018 = vpack.c.b16 %v944, %v942
        %v1019 = vpack.c.b16 %v945, %v943
        %v1020 = vpack.c.b16 %v948, %v946
        %v1021 = vpack.c.b16 %v949, %v947
        %1094 = vxpose.xlu0.c.b16.start [1/8] %v950, 128
        %1095 = vxpose.xlu0.c.b16.cont [2/8] %v952, 128
        %1096 = vxpose.xlu0.c.b16.cont [3/8] %v954, 128
        %1097 = vxpose.xlu0.c.b16.cont [4/8] %v956, 128
        %1098 = vxpose.xlu0.c.b16.cont [5/8] %v958, 128
        %1099 = vxpose.xlu0.c.b16.cont [6/8] %v960, 128
        %1100 = vxpose.xlu0.c.b16.cont [7/8] %v962, 128
        %1101 = vxpose.xlu0.c.b16.end [8/8] %v964, 128
        %v1102 = vpop.trf.xlu0
        %v1103 = vpop.trf.xlu0
        %v1104 = vpop.trf.xlu0
        %v1105 = vpop.trf.xlu0
        %v1106 = vpop.trf.xlu0
        %v1107 = vpop.trf.xlu0
        %v1108 = vpop.trf.xlu0
        %v1109 = vpop.trf.xlu0
        %1110 = vxpose.xlu0.c.b16.start [1/8] %v951, 128
        %1111 = vxpose.xlu0.c.b16.cont [2/8] %v953, 128
        %1112 = vxpose.xlu0.c.b16.cont [3/8] %v955, 128
        %1113 = vxpose.xlu0.c.b16.cont [4/8] %v957, 128
        %1114 = vxpose.xlu0.c.b16.cont [5/8] %v959, 128
        %1115 = vxpose.xlu0.c.b16.cont [6/8] %v961, 128
        %1116 = vxpose.xlu0.c.b16.cont [7/8] %v963, 128
        %1117 = vxpose.xlu0.c.b16.end [8/8] %v965, 128
        %v1118 = vpop.trf.xlu0
        %v1119 = vpop.trf.xlu0
        %v1120 = vpop.trf.xlu0
        %v1121 = vpop.trf.xlu0
        %v1122 = vpop.trf.xlu0
        %v1123 = vpop.trf.xlu0
        %v1124 = vpop.trf.xlu0
        %v1125 = vpop.trf.xlu0
        %1126 = vxpose.xlu0.c.b16.start [1/8] %v966, 128
        %1127 = vxpose.xlu0.c.b16.cont [2/8] %v968, 128
        %1128 = vxpose.xlu0.c.b16.cont [3/8] %v970, 128
        %1129 = vxpose.xlu0.c.b16.cont [4/8] %v972, 128
        %1130 = vxpose.xlu0.c.b16.cont [5/8] %v974, 128
        %1131 = vxpose.xlu0.c.b16.cont [6/8] %v976, 128
        %1132 = vxpose.xlu0.c.b16.cont [7/8] %v978, 128
        %1133 = vxpose.xlu0.c.b16.end [8/8] %v980, 128
        %v1134 = vpop.trf.xlu0
        %v1135 = vpop.trf.xlu0
        %v1136 = vpop.trf.xlu0
        %v1137 = vpop.trf.xlu0
        %v1138 = vpop.trf.xlu0
        %v1139 = vpop.trf.xlu0
        %v1140 = vpop.trf.xlu0
        %v1141 = vpop.trf.xlu0
        %1142 = vxpose.xlu0.c.b16.start [1/8] %v967, 128
        %1143 = vxpose.xlu0.c.b16.cont [2/8] %v969, 128
        %1144 = vxpose.xlu0.c.b16.cont [3/8] %v971, 128
        %1145 = vxpose.xlu0.c.b16.cont [4/8] %v973, 128
        %1146 = vxpose.xlu0.c.b16.cont [5/8] %v975, 128
        %1147 = vxpose.xlu0.c.b16.cont [6/8] %v977, 128
        %1148 = vxpose.xlu0.c.b16.cont [7/8] %v979, 128
        %1149 = vxpose.xlu0.c.b16.end [8/8] %v981, 128
        %v1150 = vpop.trf.xlu0
        %v1151 = vpop.trf.xlu0
        %v1152 = vpop.trf.xlu0
        %v1153 = vpop.trf.xlu0
        %v1154 = vpop.trf.xlu0
        %v1155 = vpop.trf.xlu0
        %v1156 = vpop.trf.xlu0
        %v1157 = vpop.trf.xlu0
        %1158 = vxpose.xlu0.c.b16.start [1/8] %v982, 128
        %1159 = vxpose.xlu0.c.b16.cont [2/8] %v984, 128
        %1160 = vxpose.xlu0.c.b16.cont [3/8] %v986, 128
        %1161 = vxpose.xlu0.c.b16.cont [4/8] %v988, 128
        %1162 = vxpose.xlu0.c.b16.cont [5/8] %v990, 128
        %1163 = vxpose.xlu0.c.b16.cont [6/8] %v992, 128
        %1164 = vxpose.xlu0.c.b16.cont [7/8] %v994, 128
        %1165 = vxpose.xlu0.c.b16.end [8/8] %v996, 128
        %v1166 = vpop.trf.xlu0
        %v1167 = vpop.trf.xlu0
        %v1168 = vpop.trf.xlu0
        %v1169 = vpop.trf.xlu0
        %v1170 = vpop.trf.xlu0
        %v1171 = vpop.trf.xlu0
        %v1172 = vpop.trf.xlu0
        %v1173 = vpop.trf.xlu0
        %1174 = vxpose.xlu0.c.b16.start [1/8] %v983, 128
        %1175 = vxpose.xlu0.c.b16.cont [2/8] %v985, 128
        %1176 = vxpose.xlu0.c.b16.cont [3/8] %v987, 128
        %1177 = vxpose.xlu0.c.b16.cont [4/8] %v989, 128
        %1178 = vxpose.xlu0.c.b16.cont [5/8] %v991, 128
        %1179 = vxpose.xlu0.c.b16.cont [6/8] %v993, 128
        %1180 = vxpose.xlu0.c.b16.cont [7/8] %v995, 128
        %1181 = vxpose.xlu0.c.b16.end [8/8] %v997, 128
        %v1182 = vpop.trf.xlu0
        %v1183 = vpop.trf.xlu0
        %v1184 = vpop.trf.xlu0
        %v1185 = vpop.trf.xlu0
        %v1186 = vpop.trf.xlu0
        %v1187 = vpop.trf.xlu0
        %v1188 = vpop.trf.xlu0
        %v1189 = vpop.trf.xlu0
        %1190 = vxpose.xlu0.c.b16.start [1/8] %v998, 128
        %1191 = vxpose.xlu0.c.b16.cont [2/8] %v1000, 128
        %1192 = vxpose.xlu0.c.b16.cont [3/8] %v1002, 128
        %1193 = vxpose.xlu0.c.b16.cont [4/8] %v1004, 128
        %1194 = vxpose.xlu0.c.b16.cont [5/8] %v1006, 128
        %1195 = vxpose.xlu0.c.b16.cont [6/8] %v1008, 128
        %1196 = vxpose.xlu0.c.b16.cont [7/8] %v1010, 128
        %1197 = vxpose.xlu0.c.b16.end [8/8] %v1012, 128
        %v1198 = vpop.trf.xlu0
        %v1199 = vpop.trf.xlu0
        %v1200 = vpop.trf.xlu0
        %v1201 = vpop.trf.xlu0
        %v1202 = vpop.trf.xlu0
        %v1203 = vpop.trf.xlu0
        %v1204 = vpop.trf.xlu0
        %v1205 = vpop.trf.xlu0
        %1206 = vxpose.xlu0.c.b16.start [1/8] %v999, 128
        %1207 = vxpose.xlu0.c.b16.cont [2/8] %v1001, 128
        %1208 = vxpose.xlu0.c.b16.cont [3/8] %v1003, 128
        %1209 = vxpose.xlu0.c.b16.cont [4/8] %v1005, 128
        %1210 = vxpose.xlu0.c.b16.cont [5/8] %v1007, 128
        %1211 = vxpose.xlu0.c.b16.cont [6/8] %v1009, 128
        %1212 = vxpose.xlu0.c.b16.cont [7/8] %v1011, 128
        %1213 = vxpose.xlu0.c.b16.end [8/8] %v1013, 128
        %v1214 = vpop.trf.xlu0
        %v1215 = vpop.trf.xlu0
        %v1216 = vpop.trf.xlu0
        %v1217 = vpop.trf.xlu0
        %v1218 = vpop.trf.xlu0
        %v1219 = vpop.trf.xlu0
        %v1220 = vpop.trf.xlu0
        %v1221 = vpop.trf.xlu0
        %1222 = vxpose.xlu0.c.b16.start [1/8] %v1014, 128
        %1223 = vxpose.xlu0.c.b16.cont [2/8] %v1016, 128
        %1224 = vxpose.xlu0.c.b16.cont [3/8] %v1018, 128
        %1225 = vxpose.xlu0.c.b16.cont [4/8] %v1020, 128
        %1226 = vxpose.xlu0.c.b16.cont [5/8] 0, 128
        %1227 = vxpose.xlu0.c.b16.cont [6/8] 0, 128
        %1228 = vxpose.xlu0.c.b16.cont [7/8] 0, 128
        %1229 = vxpose.xlu0.c.b16.end [8/8] 0, 128
        %v1230 = vpop.trf.xlu0
        %v1231 = vpop.trf.xlu0
        %v1232 = vpop.trf.xlu0
        %v1233 = vpop.trf.xlu0
        %v1234 = vpop.trf.xlu0
        %v1235 = vpop.trf.xlu0
        %v1236 = vpop.trf.xlu0
        %v1237 = vpop.trf.xlu0
        %1238 = vxpose.xlu0.c.b16.start [1/8] %v1015, 128
        %1239 = vxpose.xlu0.c.b16.cont [2/8] %v1017, 128
        %1240 = vxpose.xlu0.c.b16.cont [3/8] %v1019, 128
        %1241 = vxpose.xlu0.c.b16.cont [4/8] %v1021, 128
        %1242 = vxpose.xlu0.c.b16.cont [5/8] 0, 128
        %1243 = vxpose.xlu0.c.b16.cont [6/8] 0, 128
        %1244 = vxpose.xlu0.c.b16.cont [7/8] 0, 128
        %1245 = vxpose.xlu0.c.b16.end [8/8] 0, 128
        %v1246 = vpop.trf.xlu0
        %v1247 = vpop.trf.xlu0
        %v1248 = vpop.trf.xlu0
        %v1249 = vpop.trf.xlu0
        %v1250 = vpop.trf.xlu0
        %v1251 = vpop.trf.xlu0
        %v1252 = vpop.trf.xlu0
        %v1253 = vpop.trf.xlu0
        %v1255 = vsel %vm457, %v1230, 0
        %v1258 = vsel %vm457, %v1231, 0
        %v1261 = vsel %vm457, %v1232, 0
        %v1264 = vsel %vm457, %v1233, 0
        %v1267 = vsel %vm457, %v1234, 0
        %v1270 = vsel %vm457, %v1235, 0
        %v1273 = vsel %vm457, %v1236, 0
        %v1276 = vsel %vm457, %v1237, 0
        %v1279 = vsel %vm457, %v1246, 0
        %v1282 = vsel %vm457, %v1247, 0
        %v1285 = vsel %vm457, %v1248, 0
        %v1288 = vsel %vm457, %v1249, 0
        %v1291 = vsel %vm457, %v1250, 0
        %v1294 = vsel %vm457, %v1251, 0
        %v1297 = vsel %vm457, %v1252, 0
        %v1300 = vsel %vm457, %v1253, 0
        %v1302 = vsel %vm457, %v407, 0
        %1304 = vmatprep.subr.bf16.mxu0 %v464
        %1305 = vmatpush1.bf16.xpose.msra.mxu0 %v460
        %1306 = vmatprep.subr.bf16.mxu0 0
        %1307 = vmatpush1.bf16.xpose.msra.mxu0 0
        %1308 = vmatprep.subr.bf16.mxu0 0
        %1309 = vmatpush1.bf16.xpose.msra.mxu0 0
        %1310 = vmatprep.subr.bf16.mxu0 0
        %1311 = vmatpush1.bf16.xpose.msra.mxu0 0
        %1312 = vmatprep.subr.bf16.mxu0 0
        %1313 = vmatpush1.bf16.xpose.msra.mxu0 0
        %1314 = vmatprep.subr.bf16.mxu0 0
        %1315 = vmatpush1.bf16.xpose.msra.mxu0 0
        %1316 = vmatprep.subr.bf16.mxu0 0
        %1317 = vmatpush1.bf16.xpose.msra.mxu0 0
        %1318 = vmatprep.subr.bf16.mxu0 0
        %1319 = vmatpush1.bf16.xpose.msra.mxu0 0
        %1320 = vmatprep.subr.bf16.mxu0 0
        %1321 = vmatpush1.bf16.xpose.msra.mxu0 0
        %1322 = vmatprep.subr.bf16.mxu0 0
        %1323 = vmatpush1.bf16.xpose.msra.mxu0 0
        %1324 = vmatprep.subr.bf16.mxu0 0
        %1325 = vmatpush1.bf16.xpose.msra.mxu0 0
        %1326 = vmatprep.subr.bf16.mxu0 0
        %1327 = vmatpush1.bf16.xpose.msra.mxu0 0
        %1328 = vmatprep.subr.bf16.mxu0 0
        %1329 = vmatpush1.bf16.xpose.msra.mxu0 0
        %1330 = vmatprep.subr.bf16.mxu0 0
        %1331 = vmatpush1.bf16.xpose.msra.mxu0 0
        %1332 = vmatprep.subr.bf16.mxu0 0
        %1333 = vmatpush1.bf16.xpose.msra.mxu0 0
        %1334 = vmatprep.subr.bf16.mxu0 0
        %1335 = vmatpush1.bf16.xpose.msra.mxu0 0
        %1336 = vmatprep.mubr.bf16.mxu0 %v1134
        %1337 = vmatmul.mubr.bf16.gmra.mrb[0].mxu0 %v1102
        %v1338 = vpop.f32.mrb[0].mxu0
        %v1339 = vadd.f32 %v577, %v1338
        %v1340 = vpop.f32.mrb[0].mxu0
        %v1341 = vpop.f32.mrb[0].mxu0
        %v1342 = vadd.f32 %v582, %v1341
        %v1343 = vpop.f32.mrb[0].mxu0
        %1344 = vmatprep.mubr.bf16.mxu0 %v1135
        %1345 = vmatmul.mubr.bf16.gmra.mrb[0].mxu0 %v1103
        %v1346 = vpop.f32.mrb[0].mxu0
        %v1347 = vadd.f32 %v587, %v1346
        %v1348 = vpop.f32.mrb[0].mxu0
        %v1349 = vpop.f32.mrb[0].mxu0
        %v1350 = vadd.f32 %v592, %v1349
        %v1351 = vpop.f32.mrb[0].mxu0
        %1352 = vmatprep.mubr.bf16.mxu0 %v1136
        %1353 = vmatmul.mubr.bf16.gmra.mrb[0].mxu0 %v1104
        %v1354 = vpop.f32.mrb[0].mxu0
        %v1355 = vadd.f32 %v597, %v1354
        %v1356 = vpop.f32.mrb[0].mxu0
        %v1357 = vpop.f32.mrb[0].mxu0
        %v1358 = vadd.f32 %v602, %v1357
        %v1359 = vpop.f32.mrb[0].mxu0
        %1360 = vmatprep.mubr.bf16.mxu0 %v1137
        %1361 = vmatmul.mubr.bf16.gmra.mrb[0].mxu0 %v1105
        %v1362 = vpop.f32.mrb[0].mxu0
        %v1363 = vadd.f32 %v607, %v1362
        %v1364 = vpop.f32.mrb[0].mxu0
        %v1365 = vpop.f32.mrb[0].mxu0
        %v1366 = vadd.f32 %v612, %v1365
        %v1367 = vpop.f32.mrb[0].mxu0
        %1368 = vmatprep.mubr.bf16.mxu0 %v1138
        %1369 = vmatmul.mubr.bf16.gmra.mrb[0].mxu0 %v1106
        %v1370 = vpop.f32.mrb[0].mxu0
        %v1371 = vadd.f32 %v617, %v1370
        %v1372 = vpop.f32.mrb[0].mxu0
        %v1373 = vpop.f32.mrb[0].mxu0
        %v1374 = vadd.f32 %v622, %v1373
        %v1375 = vpop.f32.mrb[0].mxu0
        %1376 = vmatprep.mubr.bf16.mxu0 %v1139
        %1377 = vmatmul.mubr.bf16.gmra.mrb[0].mxu0 %v1107
        %v1378 = vpop.f32.mrb[0].mxu0
        %v1379 = vadd.f32 %v627, %v1378
        %v1380 = vpop.f32.mrb[0].mxu0
        %v1381 = vpop.f32.mrb[0].mxu0
        %v1382 = vadd.f32 %v632, %v1381
        %v1383 = vpop.f32.mrb[0].mxu0
        %1384 = vmatprep.mubr.bf16.mxu0 %v1140
        %1385 = vmatmul.mubr.bf16.gmra.mrb[0].mxu0 %v1108
        %v1386 = vpop.f32.mrb[0].mxu0
        %v1387 = vadd.f32 %v637, %v1386
        %v1388 = vpop.f32.mrb[0].mxu0
        %v1389 = vpop.f32.mrb[0].mxu0
        %v1390 = vadd.f32 %v642, %v1389
        %v1391 = vpop.f32.mrb[0].mxu0
        %1392 = vmatprep.mubr.bf16.mxu0 %v1141
        %1393 = vmatmul.mubr.bf16.gmra.mrb[0].mxu0 %v1109
        %v1394 = vpop.f32.mrb[0].mxu0
        %v1395 = vadd.f32 %v647, %v1394
        %v1396 = vpop.f32.mrb[0].mxu0
        %v1397 = vpop.f32.mrb[0].mxu0
        %v1398 = vadd.f32 %v652, %v1397
        %v1399 = vpop.f32.mrb[0].mxu0
        %1400 = vmatprep.mubr.bf16.mxu0 %v1150
        %1401 = vmatmul.mubr.bf16.gmra.mrb[0].mxu0 %v1118
        %v1402 = vpop.f32.mrb[0].mxu0
        %v1403 = vadd.f32 %v657, %v1402
        %v1404 = vpop.f32.mrb[0].mxu0
        %v1405 = vpop.f32.mrb[0].mxu0
        %v1406 = vadd.f32 %v662, %v1405
        %v1407 = vpop.f32.mrb[0].mxu0
        %1408 = vmatprep.mubr.bf16.mxu0 %v1151
        %1409 = vmatmul.mubr.bf16.gmra.mrb[0].mxu0 %v1119
        %v1410 = vpop.f32.mrb[0].mxu0
        %v1411 = vadd.f32 %v667, %v1410
        %v1412 = vpop.f32.mrb[0].mxu0
        %v1413 = vpop.f32.mrb[0].mxu0
        %v1414 = vadd.f32 %v672, %v1413
        %v1415 = vpop.f32.mrb[0].mxu0
        %1416 = vmatprep.mubr.bf16.mxu0 %v1152
        %1417 = vmatmul.mubr.bf16.gmra.mrb[0].mxu0 %v1120
        %v1418 = vpop.f32.mrb[0].mxu0
        %v1419 = vadd.f32 %v677, %v1418
        %v1420 = vpop.f32.mrb[0].mxu0
        %v1421 = vpop.f32.mrb[0].mxu0
        %v1422 = vadd.f32 %v682, %v1421
        %v1423 = vpop.f32.mrb[0].mxu0
        %1424 = vmatprep.mubr.bf16.mxu0 %v1153
        %1425 = vmatmul.mubr.bf16.gmra.mrb[0].mxu0 %v1121
        %v1426 = vpop.f32.mrb[0].mxu0
        %v1427 = vadd.f32 %v687, %v1426
        %v1428 = vpop.f32.mrb[0].mxu0
        %v1429 = vpop.f32.mrb[0].mxu0
        %v1430 = vadd.f32 %v692, %v1429
        %v1431 = vpop.f32.mrb[0].mxu0
        %1432 = vmatprep.mubr.bf16.mxu0 %v1154
        %1433 = vmatmul.mubr.bf16.gmra.mrb[0].mxu0 %v1122
        %v1434 = vpop.f32.mrb[0].mxu0
        %v1435 = vadd.f32 %v697, %v1434
        %v1436 = vpop.f32.mrb[0].mxu0
        %v1437 = vpop.f32.mrb[0].mxu0
        %v1438 = vadd.f32 %v702, %v1437
        %v1439 = vpop.f32.mrb[0].mxu0
        %1440 = vmatprep.mubr.bf16.mxu0 %v1155
        %1441 = vmatmul.mubr.bf16.gmra.mrb[0].mxu0 %v1123
        %v1442 = vpop.f32.mrb[0].mxu0
        %v1443 = vadd.f32 %v707, %v1442
        %v1444 = vpop.f32.mrb[0].mxu0
        %v1445 = vpop.f32.mrb[0].mxu0
        %v1446 = vadd.f32 %v712, %v1445
        %v1447 = vpop.f32.mrb[0].mxu0
        %1448 = vmatprep.mubr.bf16.mxu0 %v1156
        %1449 = vmatmul.mubr.bf16.gmra.mrb[0].mxu0 %v1124
        %v1450 = vpop.f32.mrb[0].mxu0
        %v1451 = vadd.f32 %v717, %v1450
        %v1452 = vpop.f32.mrb[0].mxu0
        %v1453 = vpop.f32.mrb[0].mxu0
        %v1454 = vadd.f32 %v722, %v1453
        %v1455 = vpop.f32.mrb[0].mxu0
        %1456 = vmatprep.mubr.bf16.mxu0 %v1157
        %1457 = vmatmul.mubr.bf16.gmra.mrb[0].mxu0 %v1125
        %v1458 = vpop.f32.mrb[0].mxu0
        %v1459 = vadd.f32 %v727, %v1458
        %v1460 = vpop.f32.mrb[0].mxu0
        %v1461 = vpop.f32.mrb[0].mxu0
        %v1462 = vadd.f32 %v732, %v1461
        %v1463 = vpop.f32.mrb[0].mxu0
        %1464 = vdwg.mxu0
        %1465 = vmatprep.subr.bf16.mxu0 %v460
        %1466 = vmatpush1.bf16.xpose.msra.mxu0 %v468
        %1467 = vmatprep.subr.bf16.mxu0 0
        %1468 = vmatpush1.bf16.xpose.msra.mxu0 0
        %1469 = vmatprep.subr.bf16.mxu0 0
        %1470 = vmatpush1.bf16.xpose.msra.mxu0 0
        %1471 = vmatprep.subr.bf16.mxu0 0
        %1472 = vmatpush1.bf16.xpose.msra.mxu0 0
        %1473 = vmatprep.subr.bf16.mxu0 0
        %1474 = vmatpush1.bf16.xpose.msra.mxu0 0
        %1475 = vmatprep.subr.bf16.mxu0 0
        %1476 = vmatpush1.bf16.xpose.msra.mxu0 0
        %1477 = vmatprep.subr.bf16.mxu0 0
        %1478 = vmatpush1.bf16.xpose.msra.mxu0 0
        %1479 = vmatprep.subr.bf16.mxu0 0
        %1480 = vmatpush1.bf16.xpose.msra.mxu0 0
        %1481 = vmatprep.subr.bf16.mxu0 0
        %1482 = vmatpush1.bf16.xpose.msra.mxu0 0
        %1483 = vmatprep.subr.bf16.mxu0 0
        %1484 = vmatpush1.bf16.xpose.msra.mxu0 0
        %1485 = vmatprep.subr.bf16.mxu0 0
        %1486 = vmatpush1.bf16.xpose.msra.mxu0 0
        %1487 = vmatprep.subr.bf16.mxu0 0
        %1488 = vmatpush1.bf16.xpose.msra.mxu0 0
        %1489 = vmatprep.subr.bf16.mxu0 0
        %1490 = vmatpush1.bf16.xpose.msra.mxu0 0
        %1491 = vmatprep.subr.bf16.mxu0 0
        %1492 = vmatpush1.bf16.xpose.msra.mxu0 0
        %1493 = vmatprep.subr.bf16.mxu0 0
        %1494 = vmatpush1.bf16.xpose.msra.mxu0 0
        %1495 = vmatprep.subr.bf16.mxu0 0
        %1496 = vmatpush1.bf16.xpose.msra.mxu0 0
        %1497 = vmatprep.mubr.bf16.mxu0 %v1198
        %1498 = vmatmul.mubr.bf16.gmra.mrb[0].mxu0 %v1166
        %v1499 = vpop.f32.mrb[0].mxu0
        %v1500 = vadd.f32 %v1339, %v1499
        %v1501 = vpop.f32.mrb[0].mxu0
        %v1502 = vpop.f32.mrb[0].mxu0
        %v1503 = vadd.f32 %v1342, %v1502
        %v1504 = vpop.f32.mrb[0].mxu0
        %1505 = vmatprep.mubr.bf16.mxu0 %v1199
        %1506 = vmatmul.mubr.bf16.gmra.mrb[0].mxu0 %v1167
        %v1507 = vpop.f32.mrb[0].mxu0
        %v1508 = vadd.f32 %v1347, %v1507
        %v1509 = vpop.f32.mrb[0].mxu0
        %v1510 = vpop.f32.mrb[0].mxu0
        %v1511 = vadd.f32 %v1350, %v1510
        %v1512 = vpop.f32.mrb[0].mxu0
        %1513 = vmatprep.mubr.bf16.mxu0 %v1200
        %1514 = vmatmul.mubr.bf16.gmra.mrb[0].mxu0 %v1168
        %v1515 = vpop.f32.mrb[0].mxu0
        %v1516 = vadd.f32 %v1355, %v1515
        %v1517 = vpop.f32.mrb[0].mxu0
        %v1518 = vpop.f32.mrb[0].mxu0
        %v1519 = vadd.f32 %v1358, %v1518
        %v1520 = vpop.f32.mrb[0].mxu0
        %1521 = vmatprep.mubr.bf16.mxu0 %v1201
        %1522 = vmatmul.mubr.bf16.gmra.mrb[0].mxu0 %v1169
        %v1523 = vpop.f32.mrb[0].mxu0
        %v1524 = vadd.f32 %v1363, %v1523
        %v1525 = vpop.f32.mrb[0].mxu0
        %v1526 = vpop.f32.mrb[0].mxu0
        %v1527 = vadd.f32 %v1366, %v1526
        %v1528 = vpop.f32.mrb[0].mxu0
        %1529 = vmatprep.mubr.bf16.mxu0 %v1202
        %1530 = vmatmul.mubr.bf16.gmra.mrb[0].mxu0 %v1170
        %v1531 = vpop.f32.mrb[0].mxu0
        %v1532 = vadd.f32 %v1371, %v1531
        %v1533 = vpop.f32.mrb[0].mxu0
        %v1534 = vpop.f32.mrb[0].mxu0
        %v1535 = vadd.f32 %v1374, %v1534
        %v1536 = vpop.f32.mrb[0].mxu0
        %1537 = vmatprep.mubr.bf16.mxu0 %v1203
        %1538 = vmatmul.mubr.bf16.gmra.mrb[0].mxu0 %v1171
        %v1539 = vpop.f32.mrb[0].mxu0
        %v1540 = vadd.f32 %v1379, %v1539
        %v1541 = vpop.f32.mrb[0].mxu0
        %v1542 = vpop.f32.mrb[0].mxu0
        %v1543 = vadd.f32 %v1382, %v1542
        %v1544 = vpop.f32.mrb[0].mxu0
        %1545 = vmatprep.mubr.bf16.mxu0 %v1204
        %1546 = vmatmul.mubr.bf16.gmra.mrb[0].mxu0 %v1172
        %v1547 = vpop.f32.mrb[0].mxu0
        %v1548 = vadd.f32 %v1387, %v1547
        %v1549 = vpop.f32.mrb[0].mxu0
        %v1550 = vpop.f32.mrb[0].mxu0
        %v1551 = vadd.f32 %v1390, %v1550
        %v1552 = vpop.f32.mrb[0].mxu0
        %1553 = vmatprep.mubr.bf16.mxu0 %v1205
        %1554 = vmatmul.mubr.bf16.gmra.mrb[0].mxu0 %v1173
        %v1555 = vpop.f32.mrb[0].mxu0
        %v1556 = vadd.f32 %v1395, %v1555
        %v1557 = vpop.f32.mrb[0].mxu0
        %v1558 = vpop.f32.mrb[0].mxu0
        %v1559 = vadd.f32 %v1398, %v1558
        %v1560 = vpop.f32.mrb[0].mxu0
        %1561 = vmatprep.mubr.bf16.mxu0 %v1214
        %1562 = vmatmul.mubr.bf16.gmra.mrb[0].mxu0 %v1182
        %v1563 = vpop.f32.mrb[0].mxu0
        %v1564 = vadd.f32 %v1403, %v1563
        %v1565 = vpop.f32.mrb[0].mxu0
        %v1566 = vpop.f32.mrb[0].mxu0
        %v1567 = vadd.f32 %v1406, %v1566
        %v1568 = vpop.f32.mrb[0].mxu0
        %1569 = vmatprep.mubr.bf16.mxu0 %v1215
        %1570 = vmatmul.mubr.bf16.gmra.mrb[0].mxu0 %v1183
        %v1571 = vpop.f32.mrb[0].mxu0
        %v1572 = vadd.f32 %v1411, %v1571
        %v1573 = vpop.f32.mrb[0].mxu0
        %v1574 = vpop.f32.mrb[0].mxu0
        %v1575 = vadd.f32 %v1414, %v1574
        %v1576 = vpop.f32.mrb[0].mxu0
        %1577 = vmatprep.mubr.bf16.mxu0 %v1216
        %1578 = vmatmul.mubr.bf16.gmra.mrb[0].mxu0 %v1184
        %v1579 = vpop.f32.mrb[0].mxu0
        %v1580 = vadd.f32 %v1419, %v1579
        %v1581 = vpop.f32.mrb[0].mxu0
        %v1582 = vpop.f32.mrb[0].mxu0
        %v1583 = vadd.f32 %v1422, %v1582
        %v1584 = vpop.f32.mrb[0].mxu0
        %1585 = vmatprep.mubr.bf16.mxu0 %v1217
        %1586 = vmatmul.mubr.bf16.gmra.mrb[0].mxu0 %v1185
        %v1587 = vpop.f32.mrb[0].mxu0
        %v1588 = vadd.f32 %v1427, %v1587
        %v1589 = vpop.f32.mrb[0].mxu0
        %v1590 = vpop.f32.mrb[0].mxu0
        %v1591 = vadd.f32 %v1430, %v1590
        %v1592 = vpop.f32.mrb[0].mxu0
        %1593 = vmatprep.mubr.bf16.mxu0 %v1218
        %1594 = vmatmul.mubr.bf16.gmra.mrb[0].mxu0 %v1186
        %v1595 = vpop.f32.mrb[0].mxu0
        %v1596 = vadd.f32 %v1435, %v1595
        %v1597 = vpop.f32.mrb[0].mxu0
        %v1598 = vpop.f32.mrb[0].mxu0
        %v1599 = vadd.f32 %v1438, %v1598
        %v1600 = vpop.f32.mrb[0].mxu0
        %1601 = vmatprep.mubr.bf16.mxu0 %v1219
        %1602 = vmatmul.mubr.bf16.gmra.mrb[0].mxu0 %v1187
        %v1603 = vpop.f32.mrb[0].mxu0
        %v1604 = vadd.f32 %v1443, %v1603
        %v1605 = vpop.f32.mrb[0].mxu0
        %v1606 = vpop.f32.mrb[0].mxu0
        %v1607 = vadd.f32 %v1446, %v1606
        %v1608 = vpop.f32.mrb[0].mxu0
        %1609 = vmatprep.mubr.bf16.mxu0 %v1220
        %1610 = vmatmul.mubr.bf16.gmra.mrb[0].mxu0 %v1188
        %v1611 = vpop.f32.mrb[0].mxu0
        %v1612 = vadd.f32 %v1451, %v1611
        %v1613 = vpop.f32.mrb[0].mxu0
        %v1614 = vpop.f32.mrb[0].mxu0
        %v1615 = vadd.f32 %v1454, %v1614
        %v1616 = vpop.f32.mrb[0].mxu0
        %1617 = vmatprep.mubr.bf16.mxu0 %v1221
        %1618 = vmatmul.mubr.bf16.gmra.mrb[0].mxu0 %v1189
        %v1619 = vpop.f32.mrb[0].mxu0
        %v1620 = vadd.f32 %v1459, %v1619
        %v1621 = vpop.f32.mrb[0].mxu0
        %v1622 = vpop.f32.mrb[0].mxu0
        %v1623 = vadd.f32 %v1462, %v1622
        %v1624 = vpop.f32.mrb[0].mxu0
        %1625 = vdwg.mxu0
        %1626 = vmatprep.subr.bf16.mxu0 0
        %1627 = vmatpush1.bf16.xpose.msra.mxu0 %v1302
        %1628 = vmatprep.subr.bf16.mxu0 0
        %1629 = vmatpush1.bf16.xpose.msra.mxu0 0
        %1630 = vmatprep.subr.bf16.mxu0 0
        %1631 = vmatpush1.bf16.xpose.msra.mxu0 0
        %1632 = vmatprep.subr.bf16.mxu0 0
        %1633 = vmatpush1.bf16.xpose.msra.mxu0 0
        %1634 = vmatprep.subr.bf16.mxu0 0
        %1635 = vmatpush1.bf16.xpose.msra.mxu0 0
        %1636 = vmatprep.subr.bf16.mxu0 0
        %1637 = vmatpush1.bf16.xpose.msra.mxu0 0
        %1638 = vmatprep.subr.bf16.mxu0 0
        %1639 = vmatpush1.bf16.xpose.msra.mxu0 0
        %1640 = vmatprep.subr.bf16.mxu0 0
        %1641 = vmatpush1.bf16.xpose.msra.mxu0 0
        %1642 = vmatprep.subr.bf16.mxu0 0
        %1643 = vmatpush1.bf16.xpose.msra.mxu0 0
        %1644 = vmatprep.subr.bf16.mxu0 0
        %1645 = vmatpush1.bf16.xpose.msra.mxu0 0
        %1646 = vmatprep.subr.bf16.mxu0 0
        %1647 = vmatpush1.bf16.xpose.msra.mxu0 0
        %1648 = vmatprep.subr.bf16.mxu0 0
        %1649 = vmatpush1.bf16.xpose.msra.mxu0 0
        %1650 = vmatprep.subr.bf16.mxu0 0
        %1651 = vmatpush1.bf16.xpose.msra.mxu0 0
        %1652 = vmatprep.subr.bf16.mxu0 0
        %1653 = vmatpush1.bf16.xpose.msra.mxu0 0
        %1654 = vmatprep.subr.bf16.mxu0 0
        %1655 = vmatpush1.bf16.xpose.msra.mxu0 0
        %1656 = vmatprep.subr.bf16.mxu0 0
        %1657 = vmatpush1.bf16.xpose.msra.mxu0 0
        %1658 = vmatprep.mubr.bf16.mxu0 0
        %1659 = vmatmul.mubr.bf16.gmra.mrb[0].mxu0 %v1255
        %v1660 = vpop.f32.mrb[0].mxu0
        %v1661 = vadd.f32 %v1500, %v1660
        %v1662 = vpop.f32.mrb[0].mxu0
        %v1663 = vpop.f32.mrb[0].mxu0
        %v1664 = vadd.f32 %v1503, %v1663
        %v1665 = vpop.f32.mrb[0].mxu0
        %1666 = vmatprep.mubr.bf16.mxu0 0
        %1667 = vmatmul.mubr.bf16.gmra.mrb[0].mxu0 %v1258
        %v1668 = vpop.f32.mrb[0].mxu0
        %v1669 = vadd.f32 %v1508, %v1668
        %v1670 = vpop.f32.mrb[0].mxu0
        %v1671 = vpop.f32.mrb[0].mxu0
        %v1672 = vadd.f32 %v1511, %v1671
        %v1673 = vpop.f32.mrb[0].mxu0
        %1674 = vmatprep.mubr.bf16.mxu0 0
        %1675 = vmatmul.mubr.bf16.gmra.mrb[0].mxu0 %v1261
        %v1676 = vpop.f32.mrb[0].mxu0
        %v1677 = vadd.f32 %v1516, %v1676
        %v1678 = vpop.f32.mrb[0].mxu0
        %v1679 = vpop.f32.mrb[0].mxu0
        %v1680 = vadd.f32 %v1519, %v1679
        %v1681 = vpop.f32.mrb[0].mxu0
        %1682 = vmatprep.mubr.bf16.mxu0 0
        %1683 = vmatmul.mubr.bf16.gmra.mrb[0].mxu0 %v1264
        %v1684 = vpop.f32.mrb[0].mxu0
        %v1685 = vadd.f32 %v1524, %v1684
        %v1686 = vpop.f32.mrb[0].mxu0
        %v1687 = vpop.f32.mrb[0].mxu0
        %v1688 = vadd.f32 %v1527, %v1687
        %v1689 = vpop.f32.mrb[0].mxu0
        %1690 = vmatprep.mubr.bf16.mxu0 0
        %1691 = vmatmul.mubr.bf16.gmra.mrb[0].mxu0 %v1267
        %v1692 = vpop.f32.mrb[0].mxu0
        %v1693 = vadd.f32 %v1532, %v1692
        %v1694 = vpop.f32.mrb[0].mxu0
        %v1695 = vpop.f32.mrb[0].mxu0
        %v1696 = vadd.f32 %v1535, %v1695
        %v1697 = vpop.f32.mrb[0].mxu0
        %1698 = vmatprep.mubr.bf16.mxu0 0
        %1699 = vmatmul.mubr.bf16.gmra.mrb[0].mxu0 %v1270
        %v1700 = vpop.f32.mrb[0].mxu0
        %v1701 = vadd.f32 %v1540, %v1700
        %v1702 = vpop.f32.mrb[0].mxu0
        %v1703 = vpop.f32.mrb[0].mxu0
        %v1704 = vadd.f32 %v1543, %v1703
        %v1705 = vpop.f32.mrb[0].mxu0
        %1706 = vmatprep.mubr.bf16.mxu0 0
        %1707 = vmatmul.mubr.bf16.gmra.mrb[0].mxu0 %v1273
        %v1708 = vpop.f32.mrb[0].mxu0
        %v1709 = vadd.f32 %v1548, %v1708
        %v1710 = vpop.f32.mrb[0].mxu0
        %v1711 = vpop.f32.mrb[0].mxu0
        %v1712 = vadd.f32 %v1551, %v1711
        %v1713 = vpop.f32.mrb[0].mxu0
        %1714 = vmatprep.mubr.bf16.mxu0 0
        %1715 = vmatmul.mubr.bf16.gmra.mrb[0].mxu0 %v1276
        %v1716 = vpop.f32.mrb[0].mxu0
        %v1717 = vadd.f32 %v1556, %v1716
        %v1718 = vpop.f32.mrb[0].mxu0
        %v1719 = vpop.f32.mrb[0].mxu0
        %v1720 = vadd.f32 %v1559, %v1719
        %v1721 = vpop.f32.mrb[0].mxu0
        %1722 = vmatprep.mubr.bf16.mxu0 0
        %1723 = vmatmul.mubr.bf16.gmra.mrb[0].mxu0 %v1279
        %v1724 = vpop.f32.mrb[0].mxu0
        %v1725 = vadd.f32 %v1564, %v1724
        %v1726 = vpop.f32.mrb[0].mxu0
        %v1727 = vpop.f32.mrb[0].mxu0
        %v1728 = vadd.f32 %v1567, %v1727
        %v1729 = vpop.f32.mrb[0].mxu0
        %1730 = vmatprep.mubr.bf16.mxu0 0
        %1731 = vmatmul.mubr.bf16.gmra.mrb[0].mxu0 %v1282
        %v1732 = vpop.f32.mrb[0].mxu0
        %v1733 = vadd.f32 %v1572, %v1732
        %v1734 = vpop.f32.mrb[0].mxu0
        %v1735 = vpop.f32.mrb[0].mxu0
        %v1736 = vadd.f32 %v1575, %v1735
        %v1737 = vpop.f32.mrb[0].mxu0
        %1738 = vmatprep.mubr.bf16.mxu0 0
        %1739 = vmatmul.mubr.bf16.gmra.mrb[0].mxu0 %v1285
        %v1740 = vpop.f32.mrb[0].mxu0
        %v1741 = vadd.f32 %v1580, %v1740
        %v1742 = vpop.f32.mrb[0].mxu0
        %v1743 = vpop.f32.mrb[0].mxu0
        %v1744 = vadd.f32 %v1583, %v1743
        %v1745 = vpop.f32.mrb[0].mxu0
        %1746 = vmatprep.mubr.bf16.mxu0 0
        %1747 = vmatmul.mubr.bf16.gmra.mrb[0].mxu0 %v1288
        %v1748 = vpop.f32.mrb[0].mxu0
        %v1749 = vadd.f32 %v1588, %v1748
        %v1750 = vpop.f32.mrb[0].mxu0
        %v1751 = vpop.f32.mrb[0].mxu0
        %v1752 = vadd.f32 %v1591, %v1751
        %v1753 = vpop.f32.mrb[0].mxu0
        %1754 = vmatprep.mubr.bf16.mxu0 0
        %1755 = vmatmul.mubr.bf16.gmra.mrb[0].mxu0 %v1291
        %v1756 = vpop.f32.mrb[0].mxu0
        %v1757 = vadd.f32 %v1596, %v1756
        %v1758 = vpop.f32.mrb[0].mxu0
        %v1759 = vpop.f32.mrb[0].mxu0
        %v1760 = vadd.f32 %v1599, %v1759
        %v1761 = vpop.f32.mrb[0].mxu0
        %1762 = vmatprep.mubr.bf16.mxu0 0
        %1763 = vmatmul.mubr.bf16.gmra.mrb[0].mxu0 %v1294
        %v1764 = vpop.f32.mrb[0].mxu0
        %v1765 = vadd.f32 %v1604, %v1764
        %v1766 = vpop.f32.mrb[0].mxu0
        %v1767 = vpop.f32.mrb[0].mxu0
        %v1768 = vadd.f32 %v1607, %v1767
        %v1769 = vpop.f32.mrb[0].mxu0
        %1770 = vmatprep.mubr.bf16.mxu0 0
        %1771 = vmatmul.mubr.bf16.gmra.mrb[0].mxu0 %v1297
        %v1772 = vpop.f32.mrb[0].mxu0
        %v1773 = vadd.f32 %v1612, %v1772
        %v1774 = vpop.f32.mrb[0].mxu0
        %v1775 = vpop.f32.mrb[0].mxu0
        %v1776 = vadd.f32 %v1615, %v1775
        %v1777 = vpop.f32.mrb[0].mxu0
        %1778 = vmatprep.mubr.bf16.mxu0 0
        %1779 = vmatmul.mubr.bf16.gmra.mrb[0].mxu0 %v1300
        %v1780 = vpop.f32.mrb[0].mxu0
        %v1781 = vadd.f32 %v1620, %v1780
        %v1782 = vpop.f32.mrb[0].mxu0
        %v1783 = vpop.f32.mrb[0].mxu0
        %v1784 = vadd.f32 %v1623, %v1783
        %v1785 = vpop.f32.mrb[0].mxu0
        %1786 = vdwg.mxu0
        %vm1787 = vcmp.gt.f32.partialorder %v1661, 0.0
        %vm1788 = vcmp.gt.f32.partialorder %v1664, 0.0
        %vm1789 = vcmp.gt.f32.partialorder %v1669, 0.0
        %vm1790 = vcmp.gt.f32.partialorder %v1672, 0.0
        %vm1791 = vcmp.gt.f32.partialorder %v1677, 0.0
        %vm1792 = vcmp.gt.f32.partialorder %v1680, 0.0
        %vm1793 = vcmp.gt.f32.partialorder %v1685, 0.0
        %vm1794 = vcmp.gt.f32.partialorder %v1688, 0.0
        %vm1795 = vcmp.gt.f32.partialorder %v1693, 0.0
        %vm1796 = vcmp.gt.f32.partialorder %v1696, 0.0
        %vm1797 = vcmp.gt.f32.partialorder %v1701, 0.0
        %vm1798 = vcmp.gt.f32.partialorder %v1704, 0.0
        %vm1799 = vcmp.gt.f32.partialorder %v1709, 0.0
        %vm1800 = vcmp.gt.f32.partialorder %v1712, 0.0
        %vm1801 = vcmp.gt.f32.partialorder %v1717, 0.0
        %vm1802 = vcmp.gt.f32.partialorder %v1720, 0.0
        %vm1803 = vcmp.gt.f32.partialorder %v1725, 0.0
        %vm1804 = vcmp.gt.f32.partialorder %v1728, 0.0
        %vm1805 = vcmp.gt.f32.partialorder %v1733, 0.0
        %vm1806 = vcmp.gt.f32.partialorder %v1736, 0.0
        %vm1807 = vcmp.gt.f32.partialorder %v1741, 0.0
        %vm1808 = vcmp.gt.f32.partialorder %v1744, 0.0
        %vm1809 = vcmp.gt.f32.partialorder %v1749, 0.0
        %vm1810 = vcmp.gt.f32.partialorder %v1752, 0.0
        %vm1811 = vcmp.gt.f32.partialorder %v1757, 0.0
        %vm1812 = vcmp.gt.f32.partialorder %v1760, 0.0
        %vm1813 = vcmp.gt.f32.partialorder %v1765, 0.0
        %vm1814 = vcmp.gt.f32.partialorder %v1768, 0.0
        %vm1815 = vcmp.gt.f32.partialorder %v1773, 0.0
        %vm1816 = vcmp.gt.f32.partialorder %v1776, 0.0
        %vm1817 = vcmp.gt.f32.partialorder %v1781, 0.0
        %vm1818 = vcmp.gt.f32.partialorder %v1784, 0.0
        %v1819 = vmin.f32 %v1661, 0.0
        %v1820 = vmin.f32 %v1664, 0.0
        %v1821 = vmin.f32 %v1669, 0.0
        %v1822 = vmin.f32 %v1672, 0.0
        %v1823 = vmin.f32 %v1677, 0.0
        %v1824 = vmin.f32 %v1680, 0.0
        %v1825 = vmin.f32 %v1685, 0.0
        %v1826 = vmin.f32 %v1688, 0.0
        %v1827 = vmin.f32 %v1693, 0.0
        %v1828 = vmin.f32 %v1696, 0.0
        %v1829 = vmin.f32 %v1701, 0.0
        %v1830 = vmin.f32 %v1704, 0.0
        %v1831 = vmin.f32 %v1709, 0.0
        %v1832 = vmin.f32 %v1712, 0.0
        %v1833 = vmin.f32 %v1717, 0.0
        %v1834 = vmin.f32 %v1720, 0.0
        %v1835 = vmin.f32 %v1725, 0.0
        %v1836 = vmin.f32 %v1728, 0.0
        %v1837 = vmin.f32 %v1733, 0.0
        %v1838 = vmin.f32 %v1736, 0.0
        %v1839 = vmin.f32 %v1741, 0.0
        %v1840 = vmin.f32 %v1744, 0.0
        %v1841 = vmin.f32 %v1749, 0.0
        %v1842 = vmin.f32 %v1752, 0.0
        %v1843 = vmin.f32 %v1757, 0.0
        %v1844 = vmin.f32 %v1760, 0.0
        %v1845 = vmin.f32 %v1765, 0.0
        %v1846 = vmin.f32 %v1768, 0.0
        %v1847 = vmin.f32 %v1773, 0.0
        %v1848 = vmin.f32 %v1776, 0.0
        %v1849 = vmin.f32 %v1781, 0.0
        %v1850 = vmin.f32 %v1784, 0.0
        %v1851 = vmul.f32 %v1819, 1.442695
        %v1852 = vpow.pop %v1851
        %v1853 = vmul.f32 %v1820, 1.442695
        %v1854 = vpow.pop %v1853
        %v1855 = vmul.f32 %v1821, 1.442695
        %v1856 = vpow.pop %v1855
        %v1857 = vmul.f32 %v1822, 1.442695
        %v1858 = vpow.pop %v1857
        %v1859 = vmul.f32 %v1823, 1.442695
        %v1860 = vpow.pop %v1859
        %v1861 = vmul.f32 %v1824, 1.442695
        %v1862 = vpow.pop %v1861
        %v1863 = vmul.f32 %v1825, 1.442695
        %v1864 = vpow.pop %v1863
        %v1865 = vmul.f32 %v1826, 1.442695
        %v1866 = vpow.pop %v1865
        %v1867 = vmul.f32 %v1827, 1.442695
        %v1868 = vpow.pop %v1867
        %v1869 = vmul.f32 %v1828, 1.442695
        %v1870 = vpow.pop %v1869
        %v1871 = vmul.f32 %v1829, 1.442695
        %v1872 = vpow.pop %v1871
        %v1873 = vmul.f32 %v1830, 1.442695
        %v1874 = vpow.pop %v1873
        %v1875 = vmul.f32 %v1831, 1.442695
        %v1876 = vpow.pop %v1875
        %v1877 = vmul.f32 %v1832, 1.442695
        %v1878 = vpow.pop %v1877
        %v1879 = vmul.f32 %v1833, 1.442695
        %v1880 = vpow.pop %v1879
        %v1881 = vmul.f32 %v1834, 1.442695
        %v1882 = vpow.pop %v1881
        %v1883 = vmul.f32 %v1835, 1.442695
        %v1884 = vpow.pop %v1883
        %v1885 = vmul.f32 %v1836, 1.442695
        %v1886 = vpow.pop %v1885
        %v1887 = vmul.f32 %v1837, 1.442695
        %v1888 = vpow.pop %v1887
        %v1889 = vmul.f32 %v1838, 1.442695
        %v1890 = vpow.pop %v1889
        %v1891 = vmul.f32 %v1839, 1.442695
        %v1892 = vpow.pop %v1891
        %v1893 = vmul.f32 %v1840, 1.442695
        %v1894 = vpow.pop %v1893
        %v1895 = vmul.f32 %v1841, 1.442695
        %v1896 = vpow.pop %v1895
        %v1897 = vmul.f32 %v1842, 1.442695
        %v1898 = vpow.pop %v1897
        %v1899 = vmul.f32 %v1843, 1.442695
        %v1900 = vpow.pop %v1899
        %v1901 = vmul.f32 %v1844, 1.442695
        %v1902 = vpow.pop %v1901
        %v1903 = vmul.f32 %v1845, 1.442695
        %v1904 = vpow.pop %v1903
        %v1905 = vmul.f32 %v1846, 1.442695
        %v1906 = vpow.pop %v1905
        %v1907 = vmul.f32 %v1847, 1.442695
        %v1908 = vpow.pop %v1907
        %v1909 = vmul.f32 %v1848, 1.442695
        %v1910 = vpow.pop %v1909
        %v1911 = vmul.f32 %v1849, 1.442695
        %v1912 = vpow.pop %v1911
        %v1913 = vmul.f32 %v1850, 1.442695
        %v1914 = vpow.pop %v1913
        %v1915 = vsub.f32 %v1852, 1.0
        %v1916 = vsub.f32 %v1854, 1.0
        %v1917 = vsub.f32 %v1856, 1.0
        %v1918 = vsub.f32 %v1858, 1.0
        %v1919 = vsub.f32 %v1860, 1.0
        %v1920 = vsub.f32 %v1862, 1.0
        %v1921 = vsub.f32 %v1864, 1.0
        %v1922 = vsub.f32 %v1866, 1.0
        %v1923 = vsub.f32 %v1868, 1.0
        %v1924 = vsub.f32 %v1870, 1.0
        %v1925 = vsub.f32 %v1872, 1.0
        %v1926 = vsub.f32 %v1874, 1.0
        %v1927 = vsub.f32 %v1876, 1.0
        %v1928 = vsub.f32 %v1878, 1.0
        %v1929 = vsub.f32 %v1880, 1.0
        %v1930 = vsub.f32 %v1882, 1.0
        %v1931 = vsub.f32 %v1884, 1.0
        %v1932 = vsub.f32 %v1886, 1.0
        %v1933 = vsub.f32 %v1888, 1.0
        %v1934 = vsub.f32 %v1890, 1.0
        %v1935 = vsub.f32 %v1892, 1.0
        %v1936 = vsub.f32 %v1894, 1.0
        %v1937 = vsub.f32 %v1896, 1.0
        %v1938 = vsub.f32 %v1898, 1.0
        %v1939 = vsub.f32 %v1900, 1.0
        %v1940 = vsub.f32 %v1902, 1.0
        %v1941 = vsub.f32 %v1904, 1.0
        %v1942 = vsub.f32 %v1906, 1.0
        %v1943 = vsub.f32 %v1908, 1.0
        %v1944 = vsub.f32 %v1910, 1.0
        %v1945 = vsub.f32 %v1912, 1.0
        %v1946 = vsub.f32 %v1914, 1.0
        %v1947 = vsel %vm1787, %v1661, %v1915
        %v1948 = vsel %vm1788, %v1664, %v1916
        %v1949 = vsel %vm1789, %v1669, %v1917
        %v1950 = vsel %vm1790, %v1672, %v1918
        %v1951 = vsel %vm1791, %v1677, %v1919
        %v1952 = vsel %vm1792, %v1680, %v1920
        %v1953 = vsel %vm1793, %v1685, %v1921
        %v1954 = vsel %vm1794, %v1688, %v1922
        %v1955 = vsel %vm1795, %v1693, %v1923
        %v1956 = vsel %vm1796, %v1696, %v1924
        %v1957 = vsel %vm1797, %v1701, %v1925
        %v1958 = vsel %vm1798, %v1704, %v1926
        %v1959 = vsel %vm1799, %v1709, %v1927
        %v1960 = vsel %vm1800, %v1712, %v1928
        %v1961 = vsel %vm1801, %v1717, %v1929
        %v1962 = vsel %vm1802, %v1720, %v1930
        %v1963 = vsel %vm1803, %v1725, %v1931
        %v1964 = vsel %vm1804, %v1728, %v1932
        %v1965 = vsel %vm1805, %v1733, %v1933
        %v1966 = vsel %vm1806, %v1736, %v1934
        %v1967 = vsel %vm1807, %v1741, %v1935
        %v1968 = vsel %vm1808, %v1744, %v1936
        %v1969 = vsel %vm1809, %v1749, %v1937
        %v1970 = vsel %vm1810, %v1752, %v1938
        %v1971 = vsel %vm1811, %v1757, %v1939
        %v1972 = vsel %vm1812, %v1760, %v1940
        %v1973 = vsel %vm1813, %v1765, %v1941
        %v1974 = vsel %vm1814, %v1768, %v1942
        %v1975 = vsel %vm1815, %v1773, %v1943
        %v1976 = vsel %vm1816, %v1776, %v1944
        %v1977 = vsel %vm1817, %v1781, %v1945
        %v1978 = vsel %vm1818, %v1784, %v1946
        %v1979 = vpack.c.bf16 %v1948, %v1947
        %v1980 = vpack.c.bf16 %v1950, %v1949
        %v1981 = vpack.c.bf16 %v1952, %v1951
        %v1982 = vpack.c.bf16 %v1954, %v1953
        %v1983 = vpack.c.bf16 %v1956, %v1955
        %v1984 = vpack.c.bf16 %v1958, %v1957
        %v1985 = vpack.c.bf16 %v1960, %v1959
        %v1986 = vpack.c.bf16 %v1962, %v1961
        %v1987 = vpack.c.bf16 %v1964, %v1963
        %v1988 = vpack.c.bf16 %v1966, %v1965
        %v1989 = vpack.c.bf16 %v1968, %v1967
        %v1990 = vpack.c.bf16 %v1970, %v1969
        %v1991 = vpack.c.bf16 %v1972, %v1971
        %v1992 = vpack.c.bf16 %v1974, %v1973
        %v1993 = vpack.c.bf16 %v1976, %v1975
        %v1994 = vpack.c.bf16 %v1978, %v1977
        %v2011 = vunpack.c.l.b16 %v1979
        %v2012 = vunpack.c.h.b16 %v1979
        %v2013 = vunpack.c.l.b16 %v1980
        %v2014 = vunpack.c.h.b16 %v1980
        %v2015 = vunpack.c.l.b16 %v1981
        %v2016 = vunpack.c.h.b16 %v1981
        %v2017 = vunpack.c.l.b16 %v1982
        %v2018 = vunpack.c.h.b16 %v1982
        %v2019 = vunpack.c.l.b16 %v1983
        %v2020 = vunpack.c.h.b16 %v1983
        %v2021 = vunpack.c.l.b16 %v1984
        %v2022 = vunpack.c.h.b16 %v1984
        %v2023 = vunpack.c.l.b16 %v1985
        %v2024 = vunpack.c.h.b16 %v1985
        %v2025 = vunpack.c.l.b16 %v1986
        %v2026 = vunpack.c.h.b16 %v1986
        %v2027 = vunpack.c.l.b16 %v1987
        %v2028 = vunpack.c.h.b16 %v1987
        %v2029 = vunpack.c.l.b16 %v1988
        %v2030 = vunpack.c.h.b16 %v1988
        %v2031 = vunpack.c.l.b16 %v1989
        %v2032 = vunpack.c.h.b16 %v1989
        %v2033 = vunpack.c.l.b16 %v1990
        %v2034 = vunpack.c.h.b16 %v1990
        %v2035 = vunpack.c.l.b16 %v1991
        %v2036 = vunpack.c.h.b16 %v1991
        %v2037 = vunpack.c.l.b16 %v1992
        %v2038 = vunpack.c.h.b16 %v1992
        %v2039 = vunpack.c.l.b16 %v1993
        %v2040 = vunpack.c.h.b16 %v1993
        %v2041 = vunpack.c.l.b16 %v1994
        %v2042 = vunpack.c.h.b16 %v1994
        %v2043 = vpack.c.b16 %v2011, %v2011
        %v2044 = vpack.c.b16 %v2012, %v2012
        %v2045 = vpack.c.b16 %v2013, %v2013
        %v2046 = vpack.c.b16 %v2014, %v2014
        %v2047 = vpack.c.b16 %v2015, %v2015
        %v2048 = vpack.c.b16 %v2016, %v2016
        %v2049 = vpack.c.b16 %v2017, %v2017
        %v2050 = vpack.c.b16 %v2018, %v2018
        %v2051 = vpack.c.b16 %v2019, %v2019
        %v2052 = vpack.c.b16 %v2020, %v2020
        %v2053 = vpack.c.b16 %v2021, %v2021
        %v2054 = vpack.c.b16 %v2022, %v2022
        %v2055 = vpack.c.b16 %v2023, %v2023
        %v2056 = vpack.c.b16 %v2024, %v2024
        %v2057 = vpack.c.b16 %v2025, %v2025
        %v2058 = vpack.c.b16 %v2026, %v2026
        %v2059 = vpack.c.b16 %v2027, %v2027
        %v2060 = vpack.c.b16 %v2028, %v2028
        %v2061 = vpack.c.b16 %v2029, %v2029
        %v2062 = vpack.c.b16 %v2030, %v2030
        %v2063 = vpack.c.b16 %v2031, %v2031
        %v2064 = vpack.c.b16 %v2032, %v2032
        %v2065 = vpack.c.b16 %v2033, %v2033
        %v2066 = vpack.c.b16 %v2034, %v2034
        %v2067 = vpack.c.b16 %v2035, %v2035
        %v2068 = vpack.c.b16 %v2036, %v2036
        %v2069 = vpack.c.b16 %v2037, %v2037
        %v2070 = vpack.c.b16 %v2038, %v2038
        %v2071 = vpack.c.b16 %v2039, %v2039
        %v2072 = vpack.c.b16 %v2040, %v2040
        %v2073 = vpack.c.b16 %v2041, %v2041
        %v2074 = vpack.c.b16 %v2042, %v2042
        %vm2107 = vcmask 27648
        %2108 = vst.msk [vmem:[%s217] sm:$0xf] %vm2107, %v2043
        %2109 = vst.msk [vmem:[%s217 + $0x4] sm:$0xf] %vm2107, %v2044
        %2110 = vst.msk [vmem:[%s217 + $0x8] sm:$0xf] %vm2107, %v2045
        %2111 = vst.msk [vmem:[%s217 + $0xc] sm:$0xf] %vm2107, %v2046
        %2112 = vst.msk [vmem:[%s217 + $0x10] sm:$0xf] %vm2107, %v2047
        %2113 = vst.msk [vmem:[%s217 + $0x14] sm:$0xf] %vm2107, %v2048
        %2114 = vst.msk [vmem:[%s217 + $0x18] sm:$0xf] %vm2107, %v2049
        %2115 = vst.msk [vmem:[%s217 + $0x1c] sm:$0xf] %vm2107, %v2050
        %2116 = vst.msk [vmem:[%s217 + $0x20] sm:$0xf] %vm2107, %v2051
        %2117 = vst.msk [vmem:[%s217 + $0x24] sm:$0xf] %vm2107, %v2052
        %2118 = vst.msk [vmem:[%s217 + $0x28] sm:$0xf] %vm2107, %v2053
        %2119 = vst.msk [vmem:[%s217 + $0x2c] sm:$0xf] %vm2107, %v2054
        %2120 = vst.msk [vmem:[%s217 + $0x30] sm:$0xf] %vm2107, %v2055
        %2121 = vst.msk [vmem:[%s217 + $0x34] sm:$0xf] %vm2107, %v2056
        %2122 = vst.msk [vmem:[%s217 + $0x38] sm:$0xf] %vm2107, %v2057
        %2123 = vst.msk [vmem:[%s217 + $0x3c] sm:$0xf] %vm2107, %v2058
        %2124 = vst.msk [vmem:[%s217 + $0x40] sm:$0xf] %vm2107, %v2059
        %2125 = vst.msk [vmem:[%s217 + $0x44] sm:$0xf] %vm2107, %v2060
        %2126 = vst.msk [vmem:[%s217 + $0x48] sm:$0xf] %vm2107, %v2061
        %2127 = vst.msk [vmem:[%s217 + $0x4c] sm:$0xf] %vm2107, %v2062
        %2128 = vst.msk [vmem:[%s217 + $0x50] sm:$0xf] %vm2107, %v2063
        %2129 = vst.msk [vmem:[%s217 + $0x54] sm:$0xf] %vm2107, %v2064
        %2130 = vst.msk [vmem:[%s217 + $0x58] sm:$0xf] %vm2107, %v2065
        %2131 = vst.msk [vmem:[%s217 + $0x5c] sm:$0xf] %vm2107, %v2066
        %2132 = vst.msk [vmem:[%s217 + $0x60] sm:$0xf] %vm2107, %v2067
        %2133 = vst.msk [vmem:[%s217 + $0x64] sm:$0xf] %vm2107, %v2068
        %2134 = vst.msk [vmem:[%s217 + $0x68] sm:$0xf] %vm2107, %v2069
        %2135 = vst.msk [vmem:[%s217 + $0x6c] sm:$0xf] %vm2107, %v2070
        %2136 = vst.msk [vmem:[%s217 + $0x70] sm:$0xf] %vm2107, %v2071
        %2137 = vst.msk [vmem:[%s217 + $0x74] sm:$0xf] %vm2107, %v2072
        %2138 = vst.msk [vmem:[%s217 + $0x78] sm:$0xf] %vm2107, %v2073
        %2139 = vst.msk [vmem:[%s217 + $0x7c] sm:$0xf] %vm2107, %v2074
        %s2140 = sand.u32 %s97, 1
        %s2141 = scalar_lea.sflag [#allocation4], %s2140
        %s2142 = sand.u32 %s97, 1
        %s2143 = smul.addr %s2142, 128
        %s2144 = scalar_lea.vmem [#allocation8], %s2143
        // Predicated region
        $region45: #{tpu_custom_call.1} parent=31 // pred_check
          %p2145 = pneg %p107
        $region46: #{tpu_custom_call.1} parent=31 // pred_check_branch
          %2147 = sbr.rel (%p2145) target = $region48
        $region47: #{tpu_custom_call.1} parent=31 // pred_region
          %s2149 = ssub.s32 2048, 2048
          %2150 = vsyncadd %s2141, %s2149
          %s2151 = smul.addr %s21, 32
          %s2152 = smul.addr %s2151, 64
          %s2153 = scalar_lea.hbm %s3, %s2152
          %s2154 = sshll.u32 %s2144, 4
          %s2155 = int_to_ptr.vmem [resolvable:$true] %s2154
          %2160 = dma.vmem_to_hbm [thread:$0]  %s2155, 2048, %s2153, %s2141, 64, 64, 4
        $region48: #{tpu_custom_call.1} parent=31 // pred_fallthru
          _
      $region32: #{tpu_custom_call.1} parent=5 // pred_fallthru
        _
      %p2161 = scmp.le.s32.totalorder 2, %s16
      // Predicated region
      $region49: #{tpu_custom_call.1} parent=5 // pred_check
        %p2162 = pneg %p2161
      $region50: #{tpu_custom_call.1} parent=5 // pred_check_branch
        %2164 = sbr.rel (%p2162) target = $region52
      $region51: #{tpu_custom_call.1} parent=5 // pred_region
        %s2165 = ssub.s32 %s16, 2
        // Predicated region
        $region53: #{tpu_custom_call.1} parent=51 // pred_check
          %p2166 = pneg %p113
        $region54: #{tpu_custom_call.1} parent=51 // pred_check_branch
          %2168 = sbr.rel (%p2166) target = $region56
        $region55: #{tpu_custom_call.1} parent=51 // pred_region
          %s2169 = sand.u32 %s98, 1
          %s2170 = scalar_lea.sflag [#allocation4], %s2169
          %s2171 = sand.u32 %s98, 1
          %s2172 = smul.addr %s2171, 128
          %s2173 = scalar_lea.vmem [#allocation8], %s2172
          %2174 = dma.done %s2170, 2048
        $region56: #{tpu_custom_call.1} parent=51 // pred_fallthru
          _
      $region52: #{tpu_custom_call.1} parent=5 // pred_fallthru
        _
    $region6: #{tpu_custom_call.1} parent=1 // loop_footer
      %s20 = sadd.s32 1, %s16
    $region7: #{tpu_custom_call.1} parent=1 // loop_footer_branch
      %15 = sbr.rel target = $region3
    $region8: #{tpu_custom_call.1} parent=1 // loop_exit
      _
    %2175 = vsyncpa [#allocation3], 1
    %s2176 = scalar_lea.sflag [#allocation3], 1
    %2177 = vsyncpa %s2176, 1
    %2178 = vsyncpa [#allocation6], 1
    %2179 = vsyncpa [#allocation4], 1
    %s2180 = scalar_lea.sflag [#allocation4], 1
    %2181 = vsyncpa %s2180, 1

</llo_original>
